<compile_context>
chip_gen: v7x
topology: tpu7x:2x2x1
jax: 0.10.0
libtpu: 0.0.40
codegen_flags: <defaults>
</compile_context>

<pallas_src>
import jax
import jax.numpy as jnp
from jax import lax
from jax.experimental import pallas as pl
from jax.experimental.pallas import tpu as pltpu

_EPS = 1e-6  # matches nn.CosineSimilarity(dim=2, eps=1e-06)


def _round_up(x, m):
    return -(-x // m) * m


def _cdiv(a, b):
    return -(-a // b)


def _vmem_capacity_bytes():
    """Physical VMEM of the local TPU generation (conservative fallback)."""
    try:
        return int(pltpu.get_tpu_info().vmem_capacity_bytes)
    except Exception:
        return 64 << 20  # smallest across v5e/v6e/v7x -> always safe


def _choose_tiles(B, N, D, Dv, itemsize, vmem_limit, two_core):
    """Pick (TB, TN): batch rows and keys processed per grid step."""
    N8 = _round_up(N, 8)
    lanes_k = _round_up(D, 128)   # (8,128) lane padding when D  < 128
    lanes_v = _round_up(Dv, 128)  # (8,128) lane padding when Dv < 128

    def step_vmem_bytes(tb, tn):
        # Padded VMEM footprint of one grid step: double-buffered q/k/v/out
        # blocks + f32 accumulator + dominant in-kernel f32 temporaries.
        tn8 = _round_up(tn, 8)
        q_b = tb * 8 * lanes_k * itemsize          # (TB,1,D): one (8,128) tile per b
        k_b = tb * tn8 * lanes_k * itemsize
        v_b = tb * tn8 * lanes_v * itemsize
        o_b = tb * 8 * lanes_v * itemsize
        acc_b = tb * 8 * lanes_v * 4
        tmp_b = 3 * tb * 8 * _round_up(tn, 128) * 4 + tb * tn8 * lanes_k * 4
        return 2 * (q_b + k_b + v_b + o_b) + acc_b + tmp_b

    budget = int(vmem_limit * 0.8)

    # ---- key tiling: keep the whole (8-padded) N per step unless even a minimal
    # TB=8 step would blow the budget; then halve (long-N fallback).
    tn = N8
    while tn > 8 and step_vmem_bytes(8, tn) > budget:
        tn = max(8, _round_up(tn // 2, 8))

    # ---- batch tiling: target ~4 MiB of real streamed K+V bytes per step.
    real_kv_per_row = max(1, tn * (D + Dv) * itemsize)
    tb = _round_up(max(1, (4 << 20) // real_kv_per_row), 8)
    tb = max(8, min(tb, _round_up(B, 8)))
    while tb > 8 and step_vmem_bytes(tb, tn) > budget:
        tb -= 8

    # ---- 2-TensorCore (v7x-class) balance: prefer >= 2 (ideally even) batch steps.
    if two_core:
        b_pad = _round_up(B, 8)
        steps = _cdiv(b_pad, tb)
        if steps == 1 and b_pad >= 16:
            tb = _round_up(_cdiv(b_pad, 2), 8)
        elif steps > 1 and steps % 2 == 1:
            tb = max(8, _round_up(_cdiv(b_pad, steps + 1), 8))

    return int(tb), int(tn)


def _cos_attn_kernel(q_ref, k_ref, v_ref, o_ref, acc_ref):
    # Blocks: q (TB, 1, D), k (TB, TN, D), v (TB, TN, Dv), o/acc (TB, 1, Dv).
    n = pl.program_id(1)

    @pl.when(n == 0)
    def _init():
        acc_ref[...] = jnp.zeros_like(acc_ref)

    q = q_ref[...]   # native dtype; the MXU accumulates in f32 below
    k = k_ref[...]
    v = v_ref[...]

    # <q, k_n> over the feature axis -> (TB, 1, TN), f32 accumulation (MXU).
    dots = jnp.einsum("bqd,bnd->bqn", q, k, preferred_element_type=jnp.float32)

    # ||k_n||^2 on the MXU as well (ones-vector trick) so it shares the
    # (TB, 1, TN) layout with `dots` -- no cross-lane reduce + transpose.
    ksq = jnp.einsum("bqd,bnd->bqn", jnp.ones_like(q), k * k,
                     preferred_element_type=jnp.float32)

    qf = q.astype(jnp.float32)
    qsq = jnp.sum(qf * qf, axis=-1, keepdims=True)               # (TB, 1, 1)

    # 1 / max(||q||*||k||, eps) == rsqrt(max(||q||^2*||k||^2, eps^2))  (EUP).
    inv_denom = lax.rsqrt(jnp.maximum(qsq * ksq, _EPS * _EPS))   # (TB, 1, TN)
    sim = dots * inv_denom                                       # (TB, 1, TN) f32

    # Partial output for this key tile, accumulated in f32 across the N axis.
    acc_ref[...] += jnp.einsum("bqn,bnd->bqd", sim.astype(v.dtype), v,
                               preferred_element_type=jnp.float32)

    @pl.when(n == pl.num_programs(1) - 1)
    def _store():
        o_ref[...] = acc_ref[...].astype(o_ref.dtype)


def scaled_dot_product_attention(qq, k, v, *, block_b=None, block_n=None):
    """qq: (B, D), k: (B, N, D), v: (B, N, Dv)  ->  (B, Dv)."""
    B, D = qq.shape
    Bk, N, Dk = k.shape
    Bv, Nv, Dv = v.shape
    assert Bk == B and Bv == B and Dk == D and Nv == N

    itemsize = jnp.dtype(qq.dtype).itemsize

    # Generation-aware VMEM limit: headroom on 64-MiB parts (v7x class, 2 TCs),
    # bigger tiles allowed on 128-MiB parts (v5e/v6e).
    vmem_cap = _vmem_capacity_bytes()
    if vmem_cap <= (64 << 20):
        vmem_limit = min(48 << 20, vmem_cap * 3 // 4)
        two_core = True
    else:
        vmem_limit = min(100 << 20, vmem_cap * 4 // 5)
        two_core = False

    TB, TN = _choose_tiles(B, N, D, Dv, itemsize, vmem_limit, two_core)
    if block_b is not None:
        TB = _round_up(int(block_b), 8)
    if block_n is not None:
        TN = _round_up(int(block_n), 8)

    B_pad = _round_up(B, TB)
    N_pad = _round_up(N, TN)

    # q as (B, 1, D) so both contractions are standard rank-3 batched matmuls.
    q3 = qq[:, None, :]
    if B_pad != B:
        q3 = jnp.pad(q3, ((0, B_pad - B), (0, 0), (0, 0)))
    if B_pad != B or N_pad != N:
        k = jnp.pad(k, ((0, B_pad - B), (0, N_pad - N), (0, 0)))
        v = jnp.pad(v, ((0, B_pad - B), (0, N_pad - N), (0, 0)))

    grid = (B_pad // TB, N_pad // TN)

    flops = 2 * B_pad * N_pad * (2 * D + Dv) + 6 * B_pad * N_pad
    bytes_accessed = (q3.size + k.size + v.size + B_pad * Dv) * itemsize

    out = pl.pallas_call(
        _cos_attn_kernel,
        out_shape=jax.ShapeDtypeStruct((B_pad, 1, Dv), qq.dtype),
        grid_spec=pltpu.PrefetchScalarGridSpec(
            num_scalar_prefetch=0,
            grid=grid,
            in_specs=[
                pl.BlockSpec((TB, 1, D), lambda b, n: (b, 0, 0)),
                pl.BlockSpec((TB, TN, D), lambda b, n: (b, n, 0)),
                pl.BlockSpec((TB, TN, Dv), lambda b, n: (b, n, 0)),
            ],
            out_specs=pl.BlockSpec((TB, 1, Dv), lambda b, n: (b, 0, 0)),
            scratch_shapes=[pltpu.VMEM((TB, 1, Dv), jnp.float32)],
        ),
        compiler_params=pltpu.CompilerParams(
            dimension_semantics=("parallel", "arbitrary"),
            vmem_limit_bytes=int(vmem_limit),
        ),
        cost_estimate=pl.CostEstimate(
            flops=int(flops),
            transcendentals=int(B_pad * N_pad),
            bytes_accessed=int(bytes_accessed),
        ),
    )(q3, k, v)

    return out[:B, 0, :]


def _reference(qq, k, v):
    # Pure-elementwise f32 reference (avoids XLA's default reduced-precision dot).
    q = qq[:, None, :].astype(jnp.float32)                       # (B, 1, D)
    kf = k.astype(jnp.float32)
    vf = v.astype(jnp.float32)
    dots = jnp.sum(q * kf, axis=-1)                              # (B, N)
    qn = jnp.sqrt(jnp.sum(q * q, axis=-1))                       # (B, 1)
    kn = jnp.sqrt(jnp.sum(kf * kf, axis=-1))                     # (B, N)
    sim = dots / jnp.maximum(qn * kn, _EPS)                      # (B, N)
    out = jnp.sum(sim[:, :, None] * vf, axis=1)                  # (B, Dv)
    return out.astype(qq.dtype)


if __name__ == "__main__":
    key = jax.random.PRNGKey(0)
    k0, k1, k2, k3, k4, k5 = jax.random.split(key, 6)

    # Small shapes consistent with the module: qq (B, D), k (B, N, D), v (B, N, Dv).
    B, N, D, Dv = 2, 8, 32, 32
    qq = jax.random.normal(k0, (B, D), dtype=jnp.float32)
    kk = jax.random.normal(k1, (B, N, D), dtype=jnp.float32)
    vv = jax.random.normal(k2, (B, N, Dv), dtype=jnp.float32)

    out = jax.block_until_ready(scaled_dot_product_attention(qq, kk, vv))
    ref = _reference(qq, kk, vv)
    assert out.shape == (B, Dv), out.shape
    assert jnp.allclose(out, ref, atol=1e-4, rtol=1e-4), float(jnp.max(jnp.abs(out - ref)))

    # Also exercise the padded-batch + multi-key-tile reduction path.
    B2, N2 = 5, 24
    qq2 = jax.random.normal(k3, (B2, D), dtype=jnp.float32)
    kk2 = jax.random.normal(k4, (B2, N2, D), dtype=jnp.float32)
    vv2 = jax.random.normal(k5, (B2, N2, Dv), dtype=jnp.float32)
    out2 = jax.block_until_ready(
        scaled_dot_product_attention(qq2, kk2, vv2, block_b=8, block_n=8))
    ref2 = _reference(qq2, kk2, vv2)
    assert out2.shape == (B2, Dv), out2.shape
    assert jnp.allclose(out2, ref2, atol=1e-4, rtol=1e-4), float(jnp.max(jnp.abs(out2 - ref2)))

    print("KERNEL_OK")
</pallas_src>

<mosaic_0001>
module attributes {stable_mosaic.version = 11 : i64} {
  func.func @_cos_attn_kernel(%arg0: i32, %arg1: i32, %arg2: memref<8x1x32xf32, #tpu.memory_space<vmem>>, %arg3: memref<8x8x32xf32, #tpu.memory_space<vmem>>, %arg4: memref<8x8x32xf32, #tpu.memory_space<vmem>>, %arg5: memref<8x1x32xf32, #tpu.memory_space<vmem>>, %arg6: memref<8x1x32xf32, #tpu.memory_space<vmem>>) attributes {dimension_semantics = [#tpu.dimension_semantics<parallel>, #tpu.dimension_semantics<arbitrary>], iteration_bounds = array<i64: 1, 1>, scalar_prefetch = 0 : i64, scratch_operands = 1 : i64, tpu.core_type = #tpu.core_type<tc>, window_params = [{transform_indices = @transform_0, window_bounds = array<i64: 8, 1, 32>}, {transform_indices = @transform_1, window_bounds = array<i64: 8, 8, 32>}, {transform_indices = @transform_2, window_bounds = array<i64: 8, 8, 32>}, {transform_indices = @transform_3, window_bounds = array<i64: 8, 1, 32>}]} {
    %c0_i32 = arith.constant 0 : i32
    %0 = arith.cmpi eq, %arg1, %c0_i32 : i32
    %1 = arith.extui %0 : i1 to i32
    %c0_i32_0 = arith.constant 0 : i32
    %2 = arith.cmpi ne, %1, %c0_i32_0 : i32
    scf.if %2 {
      %cst_22 = arith.constant 0.000000e+00 : f32
      %26 = vector.broadcast %cst_22 : f32 to vector<8x1x32xf32>
      %c0_23 = arith.constant 0 : index
      %c0_24 = arith.constant 0 : index
      %c0_25 = arith.constant 0 : index
      %27 = vector.load %arg6[%c0_23, %c0_24, %c0_25] : memref<8x1x32xf32, #tpu.memory_space<vmem>>, vector<8x1x32xf32>
      tpu.vector_store %arg6[%c0_23, %c0_24, %c0_25], %26 {strides = array<i32>} : memref<8x1x32xf32, #tpu.memory_space<vmem>>, vector<8x1x32xf32>,
    } else {
    }
    %c0 = arith.constant 0 : index
    %c0_1 = arith.constant 0 : index
    %c0_2 = arith.constant 0 : index
    %3 = vector.load %arg2[%c0, %c0_1, %c0_2] : memref<8x1x32xf32, #tpu.memory_space<vmem>>, vector<8x1x32xf32>
    %c0_3 = arith.constant 0 : index
    %c0_4 = arith.constant 0 : index
    %c0_5 = arith.constant 0 : index
    %4 = vector.load %arg3[%c0_3, %c0_4, %c0_5] : memref<8x8x32xf32, #tpu.memory_space<vmem>>, vector<8x8x32xf32>
    %c0_6 = arith.constant 0 : index
    %c0_7 = arith.constant 0 : index
    %c0_8 = arith.constant 0 : index
    %5 = vector.load %arg4[%c0_6, %c0_7, %c0_8] : memref<8x8x32xf32, #tpu.memory_space<vmem>>, vector<8x8x32xf32>
    "tpu.trace_start"() <{level = 10 : i32, message = "bqd,bnd->bqn"}> : () -> ()
    %cst = arith.constant dense<0.000000e+00> : vector<8x1x8xf32>
    %6 = tpu.matmul %3, %4, %cst {dimension_numbers = #tpu.dot_dimension_numbers<[2], [2], [1], [1], [0, 0, 0, 1, 1, 1], [0], [0]>} : vector<8x1x32xf32>, vector<8x8x32xf32>, vector<8x1x8xf32> -> vector<8x1x8xf32>
    %cst_9 = arith.constant 1.000000e+00 : f32
    "tpu.trace_stop"() : () -> ()
    %7 = vector.broadcast %cst_9 : f32 to vector<8x1x32xf32>
    %8 = arith.mulf %4, %4 : vector<8x8x32xf32>
    "tpu.trace_start"() <{level = 10 : i32, message = "bqd,bnd->bqn"}> : () -> ()
    %cst_10 = arith.constant dense<0.000000e+00> : vector<8x1x8xf32>
    %9 = tpu.matmul %7, %8, %cst_10 {dimension_numbers = #tpu.dot_dimension_numbers<[2], [2], [1], [1], [0, 0, 0, 1, 1, 1], [0], [0]>} : vector<8x1x32xf32>, vector<8x8x32xf32>, vector<8x1x8xf32> -> vector<8x1x8xf32>
    "tpu.trace_stop"() : () -> ()
    %10 = arith.mulf %3, %3 : vector<8x1x32xf32>
    %cst_11 = arith.constant dense<0.000000e+00> : vector<8x1xf32>
    %11 = vector.multi_reduction <add>, %10, %cst_11 [2] : vector<8x1x32xf32> to vector<8x1xf32>
    %12 = vector.shape_cast %11 : vector<8x1xf32> to vector<8x1x1xf32>
    %13 = vector.broadcast %12 : vector<8x1x1xf32> to vector<8x1x8xf32>
    %14 = arith.mulf %13, %9 : vector<8x1x8xf32>
    %cst_12 = arith.constant 9.99999996E-13 : f32
    %15 = vector.broadcast %cst_12 : f32 to vector<8x1x8xf32>
    %16 = arith.maximumf %14, %15 : vector<8x1x8xf32>
    %17 = math.rsqrt %16 : vector<8x1x8xf32>
    %18 = arith.mulf %6, %17 : vector<8x1x8xf32>
    %c0_13 = arith.constant 0 : index
    %c0_14 = arith.constant 0 : index
    %c0_15 = arith.constant 0 : index
    %19 = vector.load %arg6[%c0_13, %c0_14, %c0_15] : memref<8x1x32xf32, #tpu.memory_space<vmem>>, vector<8x1x32xf32>
    "tpu.trace_start"() <{level = 10 : i32, message = "bqn,bnd->bqd"}> : () -> ()
    %cst_16 = arith.constant dense<0.000000e+00> : vector<8x1x32xf32>
    %20 = tpu.matmul %18, %5, %cst_16 {dimension_numbers = #tpu.dot_dimension_numbers<[2], [1], [1], [2], [0, 0, 0, 1, 1, 2], [0], [0]>} : vector<8x1x8xf32>, vector<8x8x32xf32>, vector<8x1x32xf32> -> vector<8x1x32xf32>
    "tpu.trace_stop"() : () -> ()
    %21 = arith.addf %19, %20 : vector<8x1x32xf32>
    %c0_17 = arith.constant 0 : index
    %c0_18 = arith.constant 0 : index
    %c0_19 = arith.constant 0 : index
    %22 = vector.load %arg6[%c0_17, %c0_18, %c0_19] : memref<8x1x32xf32, #tpu.memory_space<vmem>>, vector<8x1x32xf32>
    tpu.vector_store %arg6[%c0_17, %c0_18, %c0_19], %21 {strides = array<i32>} : memref<8x1x32xf32, #tpu.memory_space<vmem>>, vector<8x1x32xf32>,
    %c0_i32_20 = arith.constant 0 : i32
    %23 = arith.cmpi eq, %arg1, %c0_i32_20 : i32
    %24 = arith.extui %23 : i1 to i32
    %c0_i32_21 = arith.constant 0 : i32
    %25 = arith.cmpi ne, %24, %c0_i32_21 : i32
    scf.if %25 {
      %c0_22 = arith.constant 0 : index
      %c0_23 = arith.constant 0 : index
      %c0_24 = arith.constant 0 : index
      %26 = vector.load %arg6[%c0_22, %c0_23, %c0_24] : memref<8x1x32xf32, #tpu.memory_space<vmem>>, vector<8x1x32xf32>
      %c0_25 = arith.constant 0 : index
      %c0_26 = arith.constant 0 : index
      %c0_27 = arith.constant 0 : index
      %27 = vector.load %arg5[%c0_25, %c0_26, %c0_27] : memref<8x1x32xf32, #tpu.memory_space<vmem>>, vector<8x1x32xf32>
      tpu.vector_store %arg5[%c0_25, %c0_26, %c0_27], %26 {strides = array<i32>} : memref<8x1x32xf32, #tpu.memory_space<vmem>>, vector<8x1x32xf32>,
    } else {
    }
    return
  }
  func.func @transform_0(%arg0: i32, %arg1: i32) -> (i32, i32, i32) {
    %c0_i32 = arith.constant 0 : i32
    %c0_i32_0 = arith.constant 0 : i32
    %c0_i32_1 = arith.constant 0 : i32
    return %arg0, %c0_i32, %c0_i32_0 : i32, i32, i32
  }
  func.func @transform_1(%arg0: i32, %arg1: i32) -> (i32, i32, i32) {
    %c0_i32 = arith.constant 0 : i32
    %c0_i32_0 = arith.constant 0 : i32
    return %arg0, %arg1, %c0_i32 : i32, i32, i32
  }
  func.func @transform_2(%arg0: i32, %arg1: i32) -> (i32, i32, i32) {
    %c0_i32 = arith.constant 0 : i32
    %c0_i32_0 = arith.constant 0 : i32
    return %arg0, %arg1, %c0_i32 : i32, i32, i32
  }
  func.func @transform_3(%arg0: i32, %arg1: i32) -> (i32, i32, i32) {
    %c0_i32 = arith.constant 0 : i32
    %c0_i32_0 = arith.constant 0 : i32
    %c0_i32_1 = arith.constant 0 : i32
    return %arg0, %c0_i32, %c0_i32_0 : i32, i32, i32
  }
}

</mosaic_0001>

<llo_original>
// kernel: tpu_custom_call.1
$region0: #{tpu_custom_call.1}
  #allocation0 [shape = 'u32[]', space=smem, size = 0x4, offset = 0x4, fixed_abs, tag = 'smem constant byte address 0x4 - core index']
  #allocation1 [shape = 'u32[144,128]{1,0:T(1,128)}', space=vmem, size = 0x12000, scoped, tag = 'internal scratch']
  #allocation2 [shape = 'f32[8,1,32]{2,1,0:T(1,128)}', space=vmem, size = 0x1000, scoped, tag = 'scratch operand']
  %s0 = inlined_call_operand.hbm [shape: f32[8,1,32], index: 0, kind: input, shape index: {}]
  %s1 = inlined_call_operand.hbm [shape: f32[8,8,32], index: 1, kind: input, shape index: {}]
  %s2 = inlined_call_operand.hbm [shape: f32[8,8,32], index: 2, kind: input, shape index: {}]
  %s3 = inlined_call_operand.hbm [shape: f32[8,1,32], index: 3, kind: output, shape index: {}]
  %s4 = sld [smem:[#allocation0]]
  $region42: #{tpu_custom_call.1} parent=0
    _
  %s6 = ssub.s32 1, %s4
  %s7 = scalar_select 0, %s6, %s4
  $region1: #{tpu_custom_call.1} parent=0
    #allocation3 [shape = 'u8[4096]{0}', space=vmem, size = 0x1000, scoped, tag = 'input window, operand 0, single buffered']
    #allocation4 [shape = 's32[1]{0}', space=sflag, size = 0x4, scoped, tag = 'scoped memory for tpu_custom_call.1']
    #allocation5 [shape = 's32[1]{0}', space=sflag, size = 0x4, scoped, tag = 'scoped memory for tpu_custom_call.1']
    #allocation6 [shape = 'u8[32768]{0}', space=vmem, size = 0x8000, scoped, tag = 'input window, operand 1, single buffered']
    #allocation7 [shape = 's32[1]{0}', space=sflag, size = 0x4, scoped, tag = 'scoped memory for tpu_custom_call.1']
    #allocation8 [shape = 'u8[32768]{0}', space=vmem, size = 0x8000, scoped, tag = 'input window, operand 2, single buffered']
    #allocation9 [shape = 'u8[4096]{0}', space=vmem, size = 0x1000, scoped, tag = 'output window, operand 0, single buffered']
    %8 = vsyncpa [#allocation4], 0
    %9 = vsyncpa [#allocation7], 0
    %10 = vsyncpa [#allocation5], 0
    // Predicated region
    $region2: #{tpu_custom_call.1} parent=1 // pred_check
      _
    $region3: #{tpu_custom_call.1} parent=1 // pred_check_branch
      %12 = sbr.rel (0) target = $region5
    $region4: #{tpu_custom_call.1} parent=1 // pred_region
      %s14 = ssub.s32 128, 128
      %15 = vsyncadd [#allocation4], %s14
      %s16 = sshll.u32 [#allocation3], 4
      %s17 = int_to_ptr.vmem [resolvable:$true] %s16
      %22 = dma.hbm_to_vmem [thread:$0]  %s0, 128, %s17, [#allocation4], 16, 16, 1
    $region5: #{tpu_custom_call.1} parent=1 // pred_fallthru
      _
    // Predicated region
    $region6: #{tpu_custom_call.1} parent=1 // pred_check
      _
    $region7: #{tpu_custom_call.1} parent=1 // pred_check_branch
      %24 = sbr.rel (0) target = $region9
    $region8: #{tpu_custom_call.1} parent=1 // pred_region
      %s26 = ssub.s32 1024, 1024
      %27 = vsyncadd [#allocation7], %s26
      %s28 = sshll.u32 [#allocation6], 4
      %s29 = int_to_ptr.vmem [resolvable:$true] %s28
      %34 = dma.hbm_to_vmem [thread:$0]  %s1, 1024, %s29, [#allocation7], 128, 128, 8
    $region9: #{tpu_custom_call.1} parent=1 // pred_fallthru
      _
    // Predicated region
    $region10: #{tpu_custom_call.1} parent=1 // pred_check
      _
    $region11: #{tpu_custom_call.1} parent=1 // pred_check_branch
      %36 = sbr.rel (0) target = $region13
    $region12: #{tpu_custom_call.1} parent=1 // pred_region
      %s38 = ssub.s32 1024, 1024
      %39 = vsyncadd [#allocation7], %s38
      %s40 = sshll.u32 [#allocation8], 4
      %s41 = int_to_ptr.vmem [resolvable:$true] %s40
      %46 = dma.hbm_to_vmem [thread:$0]  %s2, 1024, %s41, [#allocation7], 128, 128, 8
    $region13: #{tpu_custom_call.1} parent=1 // pred_fallthru
      _
    // Predicated region
    $region14: #{tpu_custom_call.1} parent=1 // pred_check
      _
    $region15: #{tpu_custom_call.1} parent=1 // pred_check_branch
      %48 = sbr.rel (0) target = $region17
    $region16: #{tpu_custom_call.1} parent=1 // pred_region
      %49 = dma.done [#allocation4], 128
    $region17: #{tpu_custom_call.1} parent=1 // pred_fallthru
      _
    // Predicated region
    $region18: #{tpu_custom_call.1} parent=1 // pred_check
      _
    $region19: #{tpu_custom_call.1} parent=1 // pred_check_branch
      %51 = sbr.rel (0) target = $region21
    $region20: #{tpu_custom_call.1} parent=1 // pred_region
      %52 = dma.done [#allocation7], 1024
    $region21: #{tpu_custom_call.1} parent=1 // pred_fallthru
      _
    // Predicated region
    $region22: #{tpu_custom_call.1} parent=1 // pred_check
      _
    $region23: #{tpu_custom_call.1} parent=1 // pred_check_branch
      %54 = sbr.rel (0) target = $region25
    $region24: #{tpu_custom_call.1} parent=1 // pred_region
      %55 = dma.done [#allocation7], 1024
    $region25: #{tpu_custom_call.1} parent=1 // pred_fallthru
      _
    %p56 = scmp.eq.s32.totalorder 0, 0
    // Predicated region
    $region26: #{tpu_custom_call.1} parent=1 // pred_check
      %p57 = pneg %p56
    $region27: #{tpu_custom_call.1} parent=1 // pred_check_branch
      %59 = sbr.rel (%p57) target = $region29
    $region28: #{tpu_custom_call.1} parent=1 // pred_region
      %vm60 = vcmask 253952
      %61 = vst.msk [vmem:[#allocation2] sm:$0x1] %vm60, 0.0
      %62 = vst.msk [vmem:[#allocation2 + $0x1] sm:$0x1] %vm60, 0.0
      %63 = vst.msk [vmem:[#allocation2 + $0x2] sm:$0x1] %vm60, 0.0
      %64 = vst.msk [vmem:[#allocation2 + $0x3] sm:$0x1] %vm60, 0.0
      %65 = vst.msk [vmem:[#allocation2 + $0x4] sm:$0x1] %vm60, 0.0
      %66 = vst.msk [vmem:[#allocation2 + $0x5] sm:$0x1] %vm60, 0.0
      %67 = vst.msk [vmem:[#allocation2 + $0x6] sm:$0x1] %vm60, 0.0
      %68 = vst.msk [vmem:[#allocation2 + $0x7] sm:$0x1] %vm60, 0.0
    $region29: #{tpu_custom_call.1} parent=1 // pred_fallthru
      _
    %v69 = vld [vmem:[#allocation3] sm:$0x1]
    %v70 = vld [vmem:[#allocation3 + $0x1] sm:$0x1]
    %v71 = vld [vmem:[#allocation3 + $0x2] sm:$0x1]
    %v72 = vld [vmem:[#allocation3 + $0x3] sm:$0x1]
    %v73 = vld [vmem:[#allocation3 + $0x4] sm:$0x1]
    %v74 = vld [vmem:[#allocation3 + $0x5] sm:$0x1]
    %v75 = vld [vmem:[#allocation3 + $0x6] sm:$0x1]
    %v76 = vld [vmem:[#allocation3 + $0x7] sm:$0x1]
    %v77 = vld [vmem:[#allocation6] sm:$0xff]
    %v78 = vld [vmem:[#allocation6 + $0x8] sm:$0xff]
    %v79 = vld [vmem:[#allocation6 + $0x10] sm:$0xff]
    %v80 = vld [vmem:[#allocation6 + $0x18] sm:$0xff]
    %v81 = vld [vmem:[#allocation6 + $0x20] sm:$0xff]
    %v82 = vld [vmem:[#allocation6 + $0x28] sm:$0xff]
    %v83 = vld [vmem:[#allocation6 + $0x30] sm:$0xff]
    %v84 = vld [vmem:[#allocation6 + $0x38] sm:$0xff]
    %v85 = vld [vmem:[#allocation8] sm:$0xff]
    %v86 = vld [vmem:[#allocation8 + $0x8] sm:$0xff]
    %v87 = vld [vmem:[#allocation8 + $0x10] sm:$0xff]
    %v88 = vld [vmem:[#allocation8 + $0x18] sm:$0xff]
    %v89 = vld [vmem:[#allocation8 + $0x20] sm:$0xff]
    %v90 = vld [vmem:[#allocation8 + $0x28] sm:$0xff]
    %v91 = vld [vmem:[#allocation8 + $0x30] sm:$0xff]
    %v92 = vld [vmem:[#allocation8 + $0x38] sm:$0xff]
    %vm93 = vcmask 261120
    %v95 = vsel %vm93, %v69, 0
    %v98 = vsel %vm93, %v77, 0
    %100 = vmatprep.subr.mxu0 0.0
    %101 = vmatpush1.xpose.msra.mxu0 %v98
    %102 = vmatprep.subr.mxu0 0.0
    %103 = vmatpush1.xpose.msra.mxu0 0.0
    %104 = vmatprep.subr.mxu0 0.0
    %105 = vmatpush1.xpose.msra.mxu0 0.0
    %106 = vmatprep.subr.mxu0 0.0
    %107 = vmatpush1.xpose.msra.mxu0 0.0
    %108 = vmatprep.subr.mxu0 0.0
    %109 = vmatpush1.xpose.msra.mxu0 0.0
    %110 = vmatprep.subr.mxu0 0.0
    %111 = vmatpush1.xpose.msra.mxu0 0.0
    %112 = vmatprep.subr.mxu0 0.0
    %113 = vmatpush1.xpose.msra.mxu0 0.0
    %114 = vmatprep.subr.mxu0 0.0
    %115 = vmatpush1.xpose.msra.mxu0 0.0
    %116 = vmatprep.subr.mxu0 0.0
    %117 = vmatpush1.xpose.msra.mxu0 0.0
    %118 = vmatprep.subr.mxu0 0.0
    %119 = vmatpush1.xpose.msra.mxu0 0.0
    %120 = vmatprep.subr.mxu0 0.0
    %121 = vmatpush1.xpose.msra.mxu0 0.0
    %122 = vmatprep.subr.mxu0 0.0
    %123 = vmatpush1.xpose.msra.mxu0 0.0
    %124 = vmatprep.subr.mxu0 0.0
    %125 = vmatpush1.xpose.msra.mxu0 0.0
    %126 = vmatprep.subr.mxu0 0.0
    %127 = vmatpush1.xpose.msra.mxu0 0.0
    %128 = vmatprep.subr.mxu0 0.0
    %129 = vmatpush1.xpose.msra.mxu0 0.0
    %130 = vmatprep.subr.mxu0 0.0
    %131 = vmatpush1.xpose.msra.mxu0 0.0
    %132 = vmatprep.subr.mxu0 0.0
    %133 = vmatpush1.xpose.msra.mxu0 0.0
    %134 = vmatprep.subr.mxu0 0.0
    %135 = vmatpush1.xpose.msra.mxu0 0.0
    %136 = vmatprep.subr.mxu0 0.0
    %137 = vmatpush1.xpose.msra.mxu0 0.0
    %138 = vmatprep.subr.mxu0 0.0
    %139 = vmatpush1.xpose.msra.mxu0 0.0
    %140 = vmatprep.subr.mxu0 0.0
    %141 = vmatpush1.xpose.msra.mxu0 0.0
    %142 = vmatprep.subr.mxu0 0.0
    %143 = vmatpush1.xpose.msra.mxu0 0.0
    %144 = vmatprep.subr.mxu0 0.0
    %145 = vmatpush1.xpose.msra.mxu0 0.0
    %146 = vmatprep.subr.mxu0 0.0
    %147 = vmatpush1.xpose.msra.mxu0 0.0
    %148 = vmatprep.subr.mxu0 0.0
    %149 = vmatpush1.xpose.msra.mxu0 0.0
    %150 = vmatprep.subr.mxu0 0.0
    %151 = vmatpush1.xpose.msra.mxu0 0.0
    %152 = vmatprep.subr.mxu0 0.0
    %153 = vmatpush1.xpose.msra.mxu0 0.0
    %154 = vmatprep.subr.mxu0 0.0
    %155 = vmatpush1.xpose.msra.mxu0 0.0
    %156 = vmatprep.subr.mxu0 0.0
    %157 = vmatpush1.xpose.msra.mxu0 0.0
    %158 = vmatprep.subr.mxu0 0.0
    %159 = vmatpush1.xpose.msra.mxu0 0.0
    %160 = vmatprep.subr.mxu0 0.0
    %161 = vmatpush1.xpose.msra.mxu0 0.0
    %162 = vmatprep.subr.mxu0 0.0
    %163 = vmatpush1.xpose.msra.mxu0 0.0
    %164 = vmatprep.mubr.f32.mxu0 0.0
    %165 = vmatmul.mubr.f32.gmra.mrb[0].mxu0 %v95
    %v166 = vpop.f32.mrb[0].mxu0
    %v167 = vadd.f32 0.0, %v166
    %v168 = vpop.f32.mrb[0].mxu0
    %169 = vdwg.mxu0
    %v171 = vsel %vm93, %v70, 0
    %v174 = vsel %vm93, %v78, 0
    %176 = vmatprep.subr.mxu0 0.0
    %177 = vmatpush1.xpose.msra.mxu0 %v174
    %178 = vmatprep.subr.mxu0 0.0
    %179 = vmatpush1.xpose.msra.mxu0 0.0
    %180 = vmatprep.subr.mxu0 0.0
    %181 = vmatpush1.xpose.msra.mxu0 0.0
    %182 = vmatprep.subr.mxu0 0.0
    %183 = vmatpush1.xpose.msra.mxu0 0.0
    %184 = vmatprep.subr.mxu0 0.0
    %185 = vmatpush1.xpose.msra.mxu0 0.0
    %186 = vmatprep.subr.mxu0 0.0
    %187 = vmatpush1.xpose.msra.mxu0 0.0
    %188 = vmatprep.subr.mxu0 0.0
    %189 = vmatpush1.xpose.msra.mxu0 0.0
    %190 = vmatprep.subr.mxu0 0.0
    %191 = vmatpush1.xpose.msra.mxu0 0.0
    %192 = vmatprep.subr.mxu0 0.0
    %193 = vmatpush1.xpose.msra.mxu0 0.0
    %194 = vmatprep.subr.mxu0 0.0
    %195 = vmatpush1.xpose.msra.mxu0 0.0
    %196 = vmatprep.subr.mxu0 0.0
    %197 = vmatpush1.xpose.msra.mxu0 0.0
    %198 = vmatprep.subr.mxu0 0.0
    %199 = vmatpush1.xpose.msra.mxu0 0.0
    %200 = vmatprep.subr.mxu0 0.0
    %201 = vmatpush1.xpose.msra.mxu0 0.0
    %202 = vmatprep.subr.mxu0 0.0
    %203 = vmatpush1.xpose.msra.mxu0 0.0
    %204 = vmatprep.subr.mxu0 0.0
    %205 = vmatpush1.xpose.msra.mxu0 0.0
    %206 = vmatprep.subr.mxu0 0.0
    %207 = vmatpush1.xpose.msra.mxu0 0.0
    %208 = vmatprep.subr.mxu0 0.0
    %209 = vmatpush1.xpose.msra.mxu0 0.0
    %210 = vmatprep.subr.mxu0 0.0
    %211 = vmatpush1.xpose.msra.mxu0 0.0
    %212 = vmatprep.subr.mxu0 0.0
    %213 = vmatpush1.xpose.msra.mxu0 0.0
    %214 = vmatprep.subr.mxu0 0.0
    %215 = vmatpush1.xpose.msra.mxu0 0.0
    %216 = vmatprep.subr.mxu0 0.0
    %217 = vmatpush1.xpose.msra.mxu0 0.0
    %218 = vmatprep.subr.mxu0 0.0
    %219 = vmatpush1.xpose.msra.mxu0 0.0
    %220 = vmatprep.subr.mxu0 0.0
    %221 = vmatpush1.xpose.msra.mxu0 0.0
    %222 = vmatprep.subr.mxu0 0.0
    %223 = vmatpush1.xpose.msra.mxu0 0.0
    %224 = vmatprep.subr.mxu0 0.0
    %225 = vmatpush1.xpose.msra.mxu0 0.0
    %226 = vmatprep.subr.mxu0 0.0
    %227 = vmatpush1.xpose.msra.mxu0 0.0
    %228 = vmatprep.subr.mxu0 0.0
    %229 = vmatpush1.xpose.msra.mxu0 0.0
    %230 = vmatprep.subr.mxu0 0.0
    %231 = vmatpush1.xpose.msra.mxu0 0.0
    %232 = vmatprep.subr.mxu0 0.0
    %233 = vmatpush1.xpose.msra.mxu0 0.0
    %234 = vmatprep.subr.mxu0 0.0
    %235 = vmatpush1.xpose.msra.mxu0 0.0
    %236 = vmatprep.subr.mxu0 0.0
    %237 = vmatpush1.xpose.msra.mxu0 0.0
    %238 = vmatprep.subr.mxu0 0.0
    %239 = vmatpush1.xpose.msra.mxu0 0.0
    %240 = vmatprep.mubr.f32.mxu0 0.0
    %241 = vmatmul.mubr.f32.gmra.mrb[0].mxu0 %v171
    %v242 = vpop.f32.mrb[0].mxu0
    %v243 = vadd.f32 0.0, %v242
    %v244 = vpop.f32.mrb[0].mxu0
    %245 = vdwg.mxu0
    %v247 = vsel %vm93, %v71, 0
    %v250 = vsel %vm93, %v79, 0
    %252 = vmatprep.subr.mxu0 0.0
    %253 = vmatpush1.xpose.msra.mxu0 %v250
    %254 = vmatprep.subr.mxu0 0.0
    %255 = vmatpush1.xpose.msra.mxu0 0.0
    %256 = vmatprep.subr.mxu0 0.0
    %257 = vmatpush1.xpose.msra.mxu0 0.0
    %258 = vmatprep.subr.mxu0 0.0
    %259 = vmatpush1.xpose.msra.mxu0 0.0
    %260 = vmatprep.subr.mxu0 0.0
    %261 = vmatpush1.xpose.msra.mxu0 0.0
    %262 = vmatprep.subr.mxu0 0.0
    %263 = vmatpush1.xpose.msra.mxu0 0.0
    %264 = vmatprep.subr.mxu0 0.0
    %265 = vmatpush1.xpose.msra.mxu0 0.0
    %266 = vmatprep.subr.mxu0 0.0
    %267 = vmatpush1.xpose.msra.mxu0 0.0
    %268 = vmatprep.subr.mxu0 0.0
    %269 = vmatpush1.xpose.msra.mxu0 0.0
    %270 = vmatprep.subr.mxu0 0.0
    %271 = vmatpush1.xpose.msra.mxu0 0.0
    %272 = vmatprep.subr.mxu0 0.0
    %273 = vmatpush1.xpose.msra.mxu0 0.0
    %274 = vmatprep.subr.mxu0 0.0
    %275 = vmatpush1.xpose.msra.mxu0 0.0
    %276 = vmatprep.subr.mxu0 0.0
    %277 = vmatpush1.xpose.msra.mxu0 0.0
    %278 = vmatprep.subr.mxu0 0.0
    %279 = vmatpush1.xpose.msra.mxu0 0.0
    %280 = vmatprep.subr.mxu0 0.0
    %281 = vmatpush1.xpose.msra.mxu0 0.0
    %282 = vmatprep.subr.mxu0 0.0
    %283 = vmatpush1.xpose.msra.mxu0 0.0
    %284 = vmatprep.subr.mxu0 0.0
    %285 = vmatpush1.xpose.msra.mxu0 0.0
    %286 = vmatprep.subr.mxu0 0.0
    %287 = vmatpush1.xpose.msra.mxu0 0.0
    %288 = vmatprep.subr.mxu0 0.0
    %289 = vmatpush1.xpose.msra.mxu0 0.0
    %290 = vmatprep.subr.mxu0 0.0
    %291 = vmatpush1.xpose.msra.mxu0 0.0
    %292 = vmatprep.subr.mxu0 0.0
    %293 = vmatpush1.xpose.msra.mxu0 0.0
    %294 = vmatprep.subr.mxu0 0.0
    %295 = vmatpush1.xpose.msra.mxu0 0.0
    %296 = vmatprep.subr.mxu0 0.0
    %297 = vmatpush1.xpose.msra.mxu0 0.0
    %298 = vmatprep.subr.mxu0 0.0
    %299 = vmatpush1.xpose.msra.mxu0 0.0
    %300 = vmatprep.subr.mxu0 0.0
    %301 = vmatpush1.xpose.msra.mxu0 0.0
    %302 = vmatprep.subr.mxu0 0.0
    %303 = vmatpush1.xpose.msra.mxu0 0.0
    %304 = vmatprep.subr.mxu0 0.0
    %305 = vmatpush1.xpose.msra.mxu0 0.0
    %306 = vmatprep.subr.mxu0 0.0
    %307 = vmatpush1.xpose.msra.mxu0 0.0
    %308 = vmatprep.subr.mxu0 0.0
    %309 = vmatpush1.xpose.msra.mxu0 0.0
    %310 = vmatprep.subr.mxu0 0.0
    %311 = vmatpush1.xpose.msra.mxu0 0.0
    %312 = vmatprep.subr.mxu0 0.0
    %313 = vmatpush1.xpose.msra.mxu0 0.0
    %314 = vmatprep.subr.mxu0 0.0
    %315 = vmatpush1.xpose.msra.mxu0 0.0
    %316 = vmatprep.mubr.f32.mxu0 0.0
    %317 = vmatmul.mubr.f32.gmra.mrb[0].mxu0 %v247
    %v318 = vpop.f32.mrb[0].mxu0
    %v319 = vadd.f32 0.0, %v318
    %v320 = vpop.f32.mrb[0].mxu0
    %321 = vdwg.mxu0
    %v323 = vsel %vm93, %v72, 0
    %v326 = vsel %vm93, %v80, 0
    %328 = vmatprep.subr.mxu0 0.0
    %329 = vmatpush1.xpose.msra.mxu0 %v326
    %330 = vmatprep.subr.mxu0 0.0
    %331 = vmatpush1.xpose.msra.mxu0 0.0
    %332 = vmatprep.subr.mxu0 0.0
    %333 = vmatpush1.xpose.msra.mxu0 0.0
    %334 = vmatprep.subr.mxu0 0.0
    %335 = vmatpush1.xpose.msra.mxu0 0.0
    %336 = vmatprep.subr.mxu0 0.0
    %337 = vmatpush1.xpose.msra.mxu0 0.0
    %338 = vmatprep.subr.mxu0 0.0
    %339 = vmatpush1.xpose.msra.mxu0 0.0
    %340 = vmatprep.subr.mxu0 0.0
    %341 = vmatpush1.xpose.msra.mxu0 0.0
    %342 = vmatprep.subr.mxu0 0.0
    %343 = vmatpush1.xpose.msra.mxu0 0.0
    %344 = vmatprep.subr.mxu0 0.0
    %345 = vmatpush1.xpose.msra.mxu0 0.0
    %346 = vmatprep.subr.mxu0 0.0
    %347 = vmatpush1.xpose.msra.mxu0 0.0
    %348 = vmatprep.subr.mxu0 0.0
    %349 = vmatpush1.xpose.msra.mxu0 0.0
    %350 = vmatprep.subr.mxu0 0.0
    %351 = vmatpush1.xpose.msra.mxu0 0.0
    %352 = vmatprep.subr.mxu0 0.0
    %353 = vmatpush1.xpose.msra.mxu0 0.0
    %354 = vmatprep.subr.mxu0 0.0
    %355 = vmatpush1.xpose.msra.mxu0 0.0
    %356 = vmatprep.subr.mxu0 0.0
    %357 = vmatpush1.xpose.msra.mxu0 0.0
    %358 = vmatprep.subr.mxu0 0.0
    %359 = vmatpush1.xpose.msra.mxu0 0.0
    %360 = vmatprep.subr.mxu0 0.0
    %361 = vmatpush1.xpose.msra.mxu0 0.0
    %362 = vmatprep.subr.mxu0 0.0
    %363 = vmatpush1.xpose.msra.mxu0 0.0
    %364 = vmatprep.subr.mxu0 0.0
    %365 = vmatpush1.xpose.msra.mxu0 0.0
    %366 = vmatprep.subr.mxu0 0.0
    %367 = vmatpush1.xpose.msra.mxu0 0.0
    %368 = vmatprep.subr.mxu0 0.0
    %369 = vmatpush1.xpose.msra.mxu0 0.0
    %370 = vmatprep.subr.mxu0 0.0
    %371 = vmatpush1.xpose.msra.mxu0 0.0
    %372 = vmatprep.subr.mxu0 0.0
    %373 = vmatpush1.xpose.msra.mxu0 0.0
    %374 = vmatprep.subr.mxu0 0.0
    %375 = vmatpush1.xpose.msra.mxu0 0.0
    %376 = vmatprep.subr.mxu0 0.0
    %377 = vmatpush1.xpose.msra.mxu0 0.0
    %378 = vmatprep.subr.mxu0 0.0
    %379 = vmatpush1.xpose.msra.mxu0 0.0
    %380 = vmatprep.subr.mxu0 0.0
    %381 = vmatpush1.xpose.msra.mxu0 0.0
    %382 = vmatprep.subr.mxu0 0.0
    %383 = vmatpush1.xpose.msra.mxu0 0.0
    %384 = vmatprep.subr.mxu0 0.0
    %385 = vmatpush1.xpose.msra.mxu0 0.0
    %386 = vmatprep.subr.mxu0 0.0
    %387 = vmatpush1.xpose.msra.mxu0 0.0
    %388 = vmatprep.subr.mxu0 0.0
    %389 = vmatpush1.xpose.msra.mxu0 0.0
    %390 = vmatprep.subr.mxu0 0.0
    %391 = vmatpush1.xpose.msra.mxu0 0.0
    %392 = vmatprep.mubr.f32.mxu0 0.0
    %393 = vmatmul.mubr.f32.gmra.mrb[0].mxu0 %v323
    %v394 = vpop.f32.mrb[0].mxu0
    %v395 = vadd.f32 0.0, %v394
    %v396 = vpop.f32.mrb[0].mxu0
    %397 = vdwg.mxu0
    %v399 = vsel %vm93, %v73, 0
    %v402 = vsel %vm93, %v81, 0
    %404 = vmatprep.subr.mxu0 0.0
    %405 = vmatpush1.xpose.msra.mxu0 %v402
    %406 = vmatprep.subr.mxu0 0.0
    %407 = vmatpush1.xpose.msra.mxu0 0.0
    %408 = vmatprep.subr.mxu0 0.0
    %409 = vmatpush1.xpose.msra.mxu0 0.0
    %410 = vmatprep.subr.mxu0 0.0
    %411 = vmatpush1.xpose.msra.mxu0 0.0
    %412 = vmatprep.subr.mxu0 0.0
    %413 = vmatpush1.xpose.msra.mxu0 0.0
    %414 = vmatprep.subr.mxu0 0.0
    %415 = vmatpush1.xpose.msra.mxu0 0.0
    %416 = vmatprep.subr.mxu0 0.0
    %417 = vmatpush1.xpose.msra.mxu0 0.0
    %418 = vmatprep.subr.mxu0 0.0
    %419 = vmatpush1.xpose.msra.mxu0 0.0
    %420 = vmatprep.subr.mxu0 0.0
    %421 = vmatpush1.xpose.msra.mxu0 0.0
    %422 = vmatprep.subr.mxu0 0.0
    %423 = vmatpush1.xpose.msra.mxu0 0.0
    %424 = vmatprep.subr.mxu0 0.0
    %425 = vmatpush1.xpose.msra.mxu0 0.0
    %426 = vmatprep.subr.mxu0 0.0
    %427 = vmatpush1.xpose.msra.mxu0 0.0
    %428 = vmatprep.subr.mxu0 0.0
    %429 = vmatpush1.xpose.msra.mxu0 0.0
    %430 = vmatprep.subr.mxu0 0.0
    %431 = vmatpush1.xpose.msra.mxu0 0.0
    %432 = vmatprep.subr.mxu0 0.0
    %433 = vmatpush1.xpose.msra.mxu0 0.0
    %434 = vmatprep.subr.mxu0 0.0
    %435 = vmatpush1.xpose.msra.mxu0 0.0
    %436 = vmatprep.subr.mxu0 0.0
    %437 = vmatpush1.xpose.msra.mxu0 0.0
    %438 = vmatprep.subr.mxu0 0.0
    %439 = vmatpush1.xpose.msra.mxu0 0.0
    %440 = vmatprep.subr.mxu0 0.0
    %441 = vmatpush1.xpose.msra.mxu0 0.0
    %442 = vmatprep.subr.mxu0 0.0
    %443 = vmatpush1.xpose.msra.mxu0 0.0
    %444 = vmatprep.subr.mxu0 0.0
    %445 = vmatpush1.xpose.msra.mxu0 0.0
    %446 = vmatprep.subr.mxu0 0.0
    %447 = vmatpush1.xpose.msra.mxu0 0.0
    %448 = vmatprep.subr.mxu0 0.0
    %449 = vmatpush1.xpose.msra.mxu0 0.0
    %450 = vmatprep.subr.mxu0 0.0
    %451 = vmatpush1.xpose.msra.mxu0 0.0
    %452 = vmatprep.subr.mxu0 0.0
    %453 = vmatpush1.xpose.msra.mxu0 0.0
    %454 = vmatprep.subr.mxu0 0.0
    %455 = vmatpush1.xpose.msra.mxu0 0.0
    %456 = vmatprep.subr.mxu0 0.0
    %457 = vmatpush1.xpose.msra.mxu0 0.0
    %458 = vmatprep.subr.mxu0 0.0
    %459 = vmatpush1.xpose.msra.mxu0 0.0
    %460 = vmatprep.subr.mxu0 0.0
    %461 = vmatpush1.xpose.msra.mxu0 0.0
    %462 = vmatprep.subr.mxu0 0.0
    %463 = vmatpush1.xpose.msra.mxu0 0.0
    %464 = vmatprep.subr.mxu0 0.0
    %465 = vmatpush1.xpose.msra.mxu0 0.0
    %466 = vmatprep.subr.mxu0 0.0
    %467 = vmatpush1.xpose.msra.mxu0 0.0
    %468 = vmatprep.mubr.f32.mxu0 0.0
    %469 = vmatmul.mubr.f32.gmra.mrb[0].mxu0 %v399
    %v470 = vpop.f32.mrb[0].mxu0
    %v471 = vadd.f32 0.0, %v470
    %v472 = vpop.f32.mrb[0].mxu0
    %473 = vdwg.mxu0
    %v475 = vsel %vm93, %v74, 0
    %v478 = vsel %vm93, %v82, 0
    %480 = vmatprep.subr.mxu0 0.0
    %481 = vmatpush1.xpose.msra.mxu0 %v478
    %482 = vmatprep.subr.mxu0 0.0
    %483 = vmatpush1.xpose.msra.mxu0 0.0
    %484 = vmatprep.subr.mxu0 0.0
    %485 = vmatpush1.xpose.msra.mxu0 0.0
    %486 = vmatprep.subr.mxu0 0.0
    %487 = vmatpush1.xpose.msra.mxu0 0.0
    %488 = vmatprep.subr.mxu0 0.0
    %489 = vmatpush1.xpose.msra.mxu0 0.0
    %490 = vmatprep.subr.mxu0 0.0
    %491 = vmatpush1.xpose.msra.mxu0 0.0
    %492 = vmatprep.subr.mxu0 0.0
    %493 = vmatpush1.xpose.msra.mxu0 0.0
    %494 = vmatprep.subr.mxu0 0.0
    %495 = vmatpush1.xpose.msra.mxu0 0.0
    %496 = vmatprep.subr.mxu0 0.0
    %497 = vmatpush1.xpose.msra.mxu0 0.0
    %498 = vmatprep.subr.mxu0 0.0
    %499 = vmatpush1.xpose.msra.mxu0 0.0
    %500 = vmatprep.subr.mxu0 0.0
    %501 = vmatpush1.xpose.msra.mxu0 0.0
    %502 = vmatprep.subr.mxu0 0.0
    %503 = vmatpush1.xpose.msra.mxu0 0.0
    %504 = vmatprep.subr.mxu0 0.0
    %505 = vmatpush1.xpose.msra.mxu0 0.0
    %506 = vmatprep.subr.mxu0 0.0
    %507 = vmatpush1.xpose.msra.mxu0 0.0
    %508 = vmatprep.subr.mxu0 0.0
    %509 = vmatpush1.xpose.msra.mxu0 0.0
    %510 = vmatprep.subr.mxu0 0.0
    %511 = vmatpush1.xpose.msra.mxu0 0.0
    %512 = vmatprep.subr.mxu0 0.0
    %513 = vmatpush1.xpose.msra.mxu0 0.0
    %514 = vmatprep.subr.mxu0 0.0
    %515 = vmatpush1.xpose.msra.mxu0 0.0
    %516 = vmatprep.subr.mxu0 0.0
    %517 = vmatpush1.xpose.msra.mxu0 0.0
    %518 = vmatprep.subr.mxu0 0.0
    %519 = vmatpush1.xpose.msra.mxu0 0.0
    %520 = vmatprep.subr.mxu0 0.0
    %521 = vmatpush1.xpose.msra.mxu0 0.0
    %522 = vmatprep.subr.mxu0 0.0
    %523 = vmatpush1.xpose.msra.mxu0 0.0
    %524 = vmatprep.subr.mxu0 0.0
    %525 = vmatpush1.xpose.msra.mxu0 0.0
    %526 = vmatprep.subr.mxu0 0.0
    %527 = vmatpush1.xpose.msra.mxu0 0.0
    %528 = vmatprep.subr.mxu0 0.0
    %529 = vmatpush1.xpose.msra.mxu0 0.0
    %530 = vmatprep.subr.mxu0 0.0
    %531 = vmatpush1.xpose.msra.mxu0 0.0
    %532 = vmatprep.subr.mxu0 0.0
    %533 = vmatpush1.xpose.msra.mxu0 0.0
    %534 = vmatprep.subr.mxu0 0.0
    %535 = vmatpush1.xpose.msra.mxu0 0.0
    %536 = vmatprep.subr.mxu0 0.0
    %537 = vmatpush1.xpose.msra.mxu0 0.0
    %538 = vmatprep.subr.mxu0 0.0
    %539 = vmatpush1.xpose.msra.mxu0 0.0
    %540 = vmatprep.subr.mxu0 0.0
    %541 = vmatpush1.xpose.msra.mxu0 0.0
    %542 = vmatprep.subr.mxu0 0.0
    %543 = vmatpush1.xpose.msra.mxu0 0.0
    %544 = vmatprep.mubr.f32.mxu0 0.0
    %545 = vmatmul.mubr.f32.gmra.mrb[0].mxu0 %v475
    %v546 = vpop.f32.mrb[0].mxu0
    %v547 = vadd.f32 0.0, %v546
    %v548 = vpop.f32.mrb[0].mxu0
    %549 = vdwg.mxu0
    %v551 = vsel %vm93, %v75, 0
    %v554 = vsel %vm93, %v83, 0
    %556 = vmatprep.subr.mxu0 0.0
    %557 = vmatpush1.xpose.msra.mxu0 %v554
    %558 = vmatprep.subr.mxu0 0.0
    %559 = vmatpush1.xpose.msra.mxu0 0.0
    %560 = vmatprep.subr.mxu0 0.0
    %561 = vmatpush1.xpose.msra.mxu0 0.0
    %562 = vmatprep.subr.mxu0 0.0
    %563 = vmatpush1.xpose.msra.mxu0 0.0
    %564 = vmatprep.subr.mxu0 0.0
    %565 = vmatpush1.xpose.msra.mxu0 0.0
    %566 = vmatprep.subr.mxu0 0.0
    %567 = vmatpush1.xpose.msra.mxu0 0.0
    %568 = vmatprep.subr.mxu0 0.0
    %569 = vmatpush1.xpose.msra.mxu0 0.0
    %570 = vmatprep.subr.mxu0 0.0
    %571 = vmatpush1.xpose.msra.mxu0 0.0
    %572 = vmatprep.subr.mxu0 0.0
    %573 = vmatpush1.xpose.msra.mxu0 0.0
    %574 = vmatprep.subr.mxu0 0.0
    %575 = vmatpush1.xpose.msra.mxu0 0.0
    %576 = vmatprep.subr.mxu0 0.0
    %577 = vmatpush1.xpose.msra.mxu0 0.0
    %578 = vmatprep.subr.mxu0 0.0
    %579 = vmatpush1.xpose.msra.mxu0 0.0
    %580 = vmatprep.subr.mxu0 0.0
    %581 = vmatpush1.xpose.msra.mxu0 0.0
    %582 = vmatprep.subr.mxu0 0.0
    %583 = vmatpush1.xpose.msra.mxu0 0.0
    %584 = vmatprep.subr.mxu0 0.0
    %585 = vmatpush1.xpose.msra.mxu0 0.0
    %586 = vmatprep.subr.mxu0 0.0
    %587 = vmatpush1.xpose.msra.mxu0 0.0
    %588 = vmatprep.subr.mxu0 0.0
    %589 = vmatpush1.xpose.msra.mxu0 0.0
    %590 = vmatprep.subr.mxu0 0.0
    %591 = vmatpush1.xpose.msra.mxu0 0.0
    %592 = vmatprep.subr.mxu0 0.0
    %593 = vmatpush1.xpose.msra.mxu0 0.0
    %594 = vmatprep.subr.mxu0 0.0
    %595 = vmatpush1.xpose.msra.mxu0 0.0
    %596 = vmatprep.subr.mxu0 0.0
    %597 = vmatpush1.xpose.msra.mxu0 0.0
    %598 = vmatprep.subr.mxu0 0.0
    %599 = vmatpush1.xpose.msra.mxu0 0.0
    %600 = vmatprep.subr.mxu0 0.0
    %601 = vmatpush1.xpose.msra.mxu0 0.0
    %602 = vmatprep.subr.mxu0 0.0
    %603 = vmatpush1.xpose.msra.mxu0 0.0
    %604 = vmatprep.subr.mxu0 0.0
    %605 = vmatpush1.xpose.msra.mxu0 0.0
    %606 = vmatprep.subr.mxu0 0.0
    %607 = vmatpush1.xpose.msra.mxu0 0.0
    %608 = vmatprep.subr.mxu0 0.0
    %609 = vmatpush1.xpose.msra.mxu0 0.0
    %610 = vmatprep.subr.mxu0 0.0
    %611 = vmatpush1.xpose.msra.mxu0 0.0
    %612 = vmatprep.subr.mxu0 0.0
    %613 = vmatpush1.xpose.msra.mxu0 0.0
    %614 = vmatprep.subr.mxu0 0.0
    %615 = vmatpush1.xpose.msra.mxu0 0.0
    %616 = vmatprep.subr.mxu0 0.0
    %617 = vmatpush1.xpose.msra.mxu0 0.0
    %618 = vmatprep.subr.mxu0 0.0
    %619 = vmatpush1.xpose.msra.mxu0 0.0
    %620 = vmatprep.mubr.f32.mxu0 0.0
    %621 = vmatmul.mubr.f32.gmra.mrb[0].mxu0 %v551
    %v622 = vpop.f32.mrb[0].mxu0
    %v623 = vadd.f32 0.0, %v622
    %v624 = vpop.f32.mrb[0].mxu0
    %625 = vdwg.mxu0
    %v627 = vsel %vm93, %v76, 0
    %v630 = vsel %vm93, %v84, 0
    %632 = vmatprep.subr.mxu0 0.0
    %633 = vmatpush1.xpose.msra.mxu0 %v630
    %634 = vmatprep.subr.mxu0 0.0
    %635 = vmatpush1.xpose.msra.mxu0 0.0
    %636 = vmatprep.subr.mxu0 0.0
    %637 = vmatpush1.xpose.msra.mxu0 0.0
    %638 = vmatprep.subr.mxu0 0.0
    %639 = vmatpush1.xpose.msra.mxu0 0.0
    %640 = vmatprep.subr.mxu0 0.0
    %641 = vmatpush1.xpose.msra.mxu0 0.0
    %642 = vmatprep.subr.mxu0 0.0
    %643 = vmatpush1.xpose.msra.mxu0 0.0
    %644 = vmatprep.subr.mxu0 0.0
    %645 = vmatpush1.xpose.msra.mxu0 0.0
    %646 = vmatprep.subr.mxu0 0.0
    %647 = vmatpush1.xpose.msra.mxu0 0.0
    %648 = vmatprep.subr.mxu0 0.0
    %649 = vmatpush1.xpose.msra.mxu0 0.0
    %650 = vmatprep.subr.mxu0 0.0
    %651 = vmatpush1.xpose.msra.mxu0 0.0
    %652 = vmatprep.subr.mxu0 0.0
    %653 = vmatpush1.xpose.msra.mxu0 0.0
    %654 = vmatprep.subr.mxu0 0.0
    %655 = vmatpush1.xpose.msra.mxu0 0.0
    %656 = vmatprep.subr.mxu0 0.0
    %657 = vmatpush1.xpose.msra.mxu0 0.0
    %658 = vmatprep.subr.mxu0 0.0
    %659 = vmatpush1.xpose.msra.mxu0 0.0
    %660 = vmatprep.subr.mxu0 0.0
    %661 = vmatpush1.xpose.msra.mxu0 0.0
    %662 = vmatprep.subr.mxu0 0.0
    %663 = vmatpush1.xpose.msra.mxu0 0.0
    %664 = vmatprep.subr.mxu0 0.0
    %665 = vmatpush1.xpose.msra.mxu0 0.0
    %666 = vmatprep.subr.mxu0 0.0
    %667 = vmatpush1.xpose.msra.mxu0 0.0
    %668 = vmatprep.subr.mxu0 0.0
    %669 = vmatpush1.xpose.msra.mxu0 0.0
    %670 = vmatprep.subr.mxu0 0.0
    %671 = vmatpush1.xpose.msra.mxu0 0.0
    %672 = vmatprep.subr.mxu0 0.0
    %673 = vmatpush1.xpose.msra.mxu0 0.0
    %674 = vmatprep.subr.mxu0 0.0
    %675 = vmatpush1.xpose.msra.mxu0 0.0
    %676 = vmatprep.subr.mxu0 0.0
    %677 = vmatpush1.xpose.msra.mxu0 0.0
    %678 = vmatprep.subr.mxu0 0.0
    %679 = vmatpush1.xpose.msra.mxu0 0.0
    %680 = vmatprep.subr.mxu0 0.0
    %681 = vmatpush1.xpose.msra.mxu0 0.0
    %682 = vmatprep.subr.mxu0 0.0
    %683 = vmatpush1.xpose.msra.mxu0 0.0
    %684 = vmatprep.subr.mxu0 0.0
    %685 = vmatpush1.xpose.msra.mxu0 0.0
    %686 = vmatprep.subr.mxu0 0.0
    %687 = vmatpush1.xpose.msra.mxu0 0.0
    %688 = vmatprep.subr.mxu0 0.0
    %689 = vmatpush1.xpose.msra.mxu0 0.0
    %690 = vmatprep.subr.mxu0 0.0
    %691 = vmatpush1.xpose.msra.mxu0 0.0
    %692 = vmatprep.subr.mxu0 0.0
    %693 = vmatpush1.xpose.msra.mxu0 0.0
    %694 = vmatprep.subr.mxu0 0.0
    %695 = vmatpush1.xpose.msra.mxu0 0.0
    %696 = vmatprep.mubr.f32.mxu0 0.0
    %697 = vmatmul.mubr.f32.gmra.mrb[0].mxu0 %v627
    %v698 = vpop.f32.mrb[0].mxu0
    %v699 = vadd.f32 0.0, %v698
    %v700 = vpop.f32.mrb[0].mxu0
    %701 = vdwg.mxu0
    %v702 = vmul.f32 %v77, %v77
    %v703 = vmul.f32 %v78, %v78
    %v704 = vmul.f32 %v79, %v79
    %v705 = vmul.f32 %v80, %v80
    %v706 = vmul.f32 %v81, %v81
    %v707 = vmul.f32 %v82, %v82
    %v708 = vmul.f32 %v83, %v83
    %v709 = vmul.f32 %v84, %v84
    %v711 = vsel %vm93, 1.0, 0
    %v714 = vsel %vm93, %v702, 0
    %716 = vmatprep.subr.mxu0 0.0
    %717 = vmatpush1.xpose.msra.mxu0 %v714
    %718 = vmatprep.subr.mxu0 0.0
    %719 = vmatpush1.xpose.msra.mxu0 0.0
    %720 = vmatprep.subr.mxu0 0.0
    %721 = vmatpush1.xpose.msra.mxu0 0.0
    %722 = vmatprep.subr.mxu0 0.0
    %723 = vmatpush1.xpose.msra.mxu0 0.0
    %724 = vmatprep.subr.mxu0 0.0
    %725 = vmatpush1.xpose.msra.mxu0 0.0
    %726 = vmatprep.subr.mxu0 0.0
    %727 = vmatpush1.xpose.msra.mxu0 0.0
    %728 = vmatprep.subr.mxu0 0.0
    %729 = vmatpush1.xpose.msra.mxu0 0.0
    %730 = vmatprep.subr.mxu0 0.0
    %731 = vmatpush1.xpose.msra.mxu0 0.0
    %732 = vmatprep.subr.mxu0 0.0
    %733 = vmatpush1.xpose.msra.mxu0 0.0
    %734 = vmatprep.subr.mxu0 0.0
    %735 = vmatpush1.xpose.msra.mxu0 0.0
    %736 = vmatprep.subr.mxu0 0.0
    %737 = vmatpush1.xpose.msra.mxu0 0.0
    %738 = vmatprep.subr.mxu0 0.0
    %739 = vmatpush1.xpose.msra.mxu0 0.0
    %740 = vmatprep.subr.mxu0 0.0
    %741 = vmatpush1.xpose.msra.mxu0 0.0
    %742 = vmatprep.subr.mxu0 0.0
    %743 = vmatpush1.xpose.msra.mxu0 0.0
    %744 = vmatprep.subr.mxu0 0.0
    %745 = vmatpush1.xpose.msra.mxu0 0.0
    %746 = vmatprep.subr.mxu0 0.0
    %747 = vmatpush1.xpose.msra.mxu0 0.0
    %748 = vmatprep.subr.mxu0 0.0
    %749 = vmatpush1.xpose.msra.mxu0 0.0
    %750 = vmatprep.subr.mxu0 0.0
    %751 = vmatpush1.xpose.msra.mxu0 0.0
    %752 = vmatprep.subr.mxu0 0.0
    %753 = vmatpush1.xpose.msra.mxu0 0.0
    %754 = vmatprep.subr.mxu0 0.0
    %755 = vmatpush1.xpose.msra.mxu0 0.0
    %756 = vmatprep.subr.mxu0 0.0
    %757 = vmatpush1.xpose.msra.mxu0 0.0
    %758 = vmatprep.subr.mxu0 0.0
    %759 = vmatpush1.xpose.msra.mxu0 0.0
    %760 = vmatprep.subr.mxu0 0.0
    %761 = vmatpush1.xpose.msra.mxu0 0.0
    %762 = vmatprep.subr.mxu0 0.0
    %763 = vmatpush1.xpose.msra.mxu0 0.0
    %764 = vmatprep.subr.mxu0 0.0
    %765 = vmatpush1.xpose.msra.mxu0 0.0
    %766 = vmatprep.subr.mxu0 0.0
    %767 = vmatpush1.xpose.msra.mxu0 0.0
    %768 = vmatprep.subr.mxu0 0.0
    %769 = vmatpush1.xpose.msra.mxu0 0.0
    %770 = vmatprep.subr.mxu0 0.0
    %771 = vmatpush1.xpose.msra.mxu0 0.0
    %772 = vmatprep.subr.mxu0 0.0
    %773 = vmatpush1.xpose.msra.mxu0 0.0
    %774 = vmatprep.subr.mxu0 0.0
    %775 = vmatpush1.xpose.msra.mxu0 0.0
    %776 = vmatprep.subr.mxu0 0.0
    %777 = vmatpush1.xpose.msra.mxu0 0.0
    %778 = vmatprep.subr.mxu0 0.0
    %779 = vmatpush1.xpose.msra.mxu0 0.0
    %780 = vmatprep.mubr.f32.mxu0 0.0
    %781 = vmatmul.mubr.f32.gmra.mrb[0].mxu0 %v711
    %v782 = vpop.f32.mrb[0].mxu0
    %v783 = vadd.f32 0.0, %v782
    %v784 = vpop.f32.mrb[0].mxu0
    %785 = vdwg.mxu0
    %v787 = vsel %vm93, %v703, 0
    %789 = vmatprep.subr.mxu0 0.0
    %790 = vmatpush1.xpose.msra.mxu0 %v787
    %791 = vmatprep.subr.mxu0 0.0
    %792 = vmatpush1.xpose.msra.mxu0 0.0
    %793 = vmatprep.subr.mxu0 0.0
    %794 = vmatpush1.xpose.msra.mxu0 0.0
    %795 = vmatprep.subr.mxu0 0.0
    %796 = vmatpush1.xpose.msra.mxu0 0.0
    %797 = vmatprep.subr.mxu0 0.0
    %798 = vmatpush1.xpose.msra.mxu0 0.0
    %799 = vmatprep.subr.mxu0 0.0
    %800 = vmatpush1.xpose.msra.mxu0 0.0
    %801 = vmatprep.subr.mxu0 0.0
    %802 = vmatpush1.xpose.msra.mxu0 0.0
    %803 = vmatprep.subr.mxu0 0.0
    %804 = vmatpush1.xpose.msra.mxu0 0.0
    %805 = vmatprep.subr.mxu0 0.0
    %806 = vmatpush1.xpose.msra.mxu0 0.0
    %807 = vmatprep.subr.mxu0 0.0
    %808 = vmatpush1.xpose.msra.mxu0 0.0
    %809 = vmatprep.subr.mxu0 0.0
    %810 = vmatpush1.xpose.msra.mxu0 0.0
    %811 = vmatprep.subr.mxu0 0.0
    %812 = vmatpush1.xpose.msra.mxu0 0.0
    %813 = vmatprep.subr.mxu0 0.0
    %814 = vmatpush1.xpose.msra.mxu0 0.0
    %815 = vmatprep.subr.mxu0 0.0
    %816 = vmatpush1.xpose.msra.mxu0 0.0
    %817 = vmatprep.subr.mxu0 0.0
    %818 = vmatpush1.xpose.msra.mxu0 0.0
    %819 = vmatprep.subr.mxu0 0.0
    %820 = vmatpush1.xpose.msra.mxu0 0.0
    %821 = vmatprep.subr.mxu0 0.0
    %822 = vmatpush1.xpose.msra.mxu0 0.0
    %823 = vmatprep.subr.mxu0 0.0
    %824 = vmatpush1.xpose.msra.mxu0 0.0
    %825 = vmatprep.subr.mxu0 0.0
    %826 = vmatpush1.xpose.msra.mxu0 0.0
    %827 = vmatprep.subr.mxu0 0.0
    %828 = vmatpush1.xpose.msra.mxu0 0.0
    %829 = vmatprep.subr.mxu0 0.0
    %830 = vmatpush1.xpose.msra.mxu0 0.0
    %831 = vmatprep.subr.mxu0 0.0
    %832 = vmatpush1.xpose.msra.mxu0 0.0
    %833 = vmatprep.subr.mxu0 0.0
    %834 = vmatpush1.xpose.msra.mxu0 0.0
    %835 = vmatprep.subr.mxu0 0.0
    %836 = vmatpush1.xpose.msra.mxu0 0.0
    %837 = vmatprep.subr.mxu0 0.0
    %838 = vmatpush1.xpose.msra.mxu0 0.0
    %839 = vmatprep.subr.mxu0 0.0
    %840 = vmatpush1.xpose.msra.mxu0 0.0
    %841 = vmatprep.subr.mxu0 0.0
    %842 = vmatpush1.xpose.msra.mxu0 0.0
    %843 = vmatprep.subr.mxu0 0.0
    %844 = vmatpush1.xpose.msra.mxu0 0.0
    %845 = vmatprep.subr.mxu0 0.0
    %846 = vmatpush1.xpose.msra.mxu0 0.0
    %847 = vmatprep.subr.mxu0 0.0
    %848 = vmatpush1.xpose.msra.mxu0 0.0
    %849 = vmatprep.subr.mxu0 0.0
    %850 = vmatpush1.xpose.msra.mxu0 0.0
    %851 = vmatprep.subr.mxu0 0.0
    %852 = vmatpush1.xpose.msra.mxu0 0.0
    %853 = vmatprep.mubr.f32.mxu0 0.0
    %854 = vmatmul.mubr.f32.gmra.mrb[0].mxu0 %v711
    %v855 = vpop.f32.mrb[0].mxu0
    %v856 = vadd.f32 0.0, %v855
    %v857 = vpop.f32.mrb[0].mxu0
    %858 = vdwg.mxu0
    %v860 = vsel %vm93, %v704, 0
    %862 = vmatprep.subr.mxu0 0.0
    %863 = vmatpush1.xpose.msra.mxu0 %v860
    %864 = vmatprep.subr.mxu0 0.0
    %865 = vmatpush1.xpose.msra.mxu0 0.0
    %866 = vmatprep.subr.mxu0 0.0
    %867 = vmatpush1.xpose.msra.mxu0 0.0
    %868 = vmatprep.subr.mxu0 0.0
    %869 = vmatpush1.xpose.msra.mxu0 0.0
    %870 = vmatprep.subr.mxu0 0.0
    %871 = vmatpush1.xpose.msra.mxu0 0.0
    %872 = vmatprep.subr.mxu0 0.0
    %873 = vmatpush1.xpose.msra.mxu0 0.0
    %874 = vmatprep.subr.mxu0 0.0
    %875 = vmatpush1.xpose.msra.mxu0 0.0
    %876 = vmatprep.subr.mxu0 0.0
    %877 = vmatpush1.xpose.msra.mxu0 0.0
    %878 = vmatprep.subr.mxu0 0.0
    %879 = vmatpush1.xpose.msra.mxu0 0.0
    %880 = vmatprep.subr.mxu0 0.0
    %881 = vmatpush1.xpose.msra.mxu0 0.0
    %882 = vmatprep.subr.mxu0 0.0
    %883 = vmatpush1.xpose.msra.mxu0 0.0
    %884 = vmatprep.subr.mxu0 0.0
    %885 = vmatpush1.xpose.msra.mxu0 0.0
    %886 = vmatprep.subr.mxu0 0.0
    %887 = vmatpush1.xpose.msra.mxu0 0.0
    %888 = vmatprep.subr.mxu0 0.0
    %889 = vmatpush1.xpose.msra.mxu0 0.0
    %890 = vmatprep.subr.mxu0 0.0
    %891 = vmatpush1.xpose.msra.mxu0 0.0
    %892 = vmatprep.subr.mxu0 0.0
    %893 = vmatpush1.xpose.msra.mxu0 0.0
    %894 = vmatprep.subr.mxu0 0.0
    %895 = vmatpush1.xpose.msra.mxu0 0.0
    %896 = vmatprep.subr.mxu0 0.0
    %897 = vmatpush1.xpose.msra.mxu0 0.0
    %898 = vmatprep.subr.mxu0 0.0
    %899 = vmatpush1.xpose.msra.mxu0 0.0
    %900 = vmatprep.subr.mxu0 0.0
    %901 = vmatpush1.xpose.msra.mxu0 0.0
    %902 = vmatprep.subr.mxu0 0.0
    %903 = vmatpush1.xpose.msra.mxu0 0.0
    %904 = vmatprep.subr.mxu0 0.0
    %905 = vmatpush1.xpose.msra.mxu0 0.0
    %906 = vmatprep.subr.mxu0 0.0
    %907 = vmatpush1.xpose.msra.mxu0 0.0
    %908 = vmatprep.subr.mxu0 0.0
    %909 = vmatpush1.xpose.msra.mxu0 0.0
    %910 = vmatprep.subr.mxu0 0.0
    %911 = vmatpush1.xpose.msra.mxu0 0.0
    %912 = vmatprep.subr.mxu0 0.0
    %913 = vmatpush1.xpose.msra.mxu0 0.0
    %914 = vmatprep.subr.mxu0 0.0
    %915 = vmatpush1.xpose.msra.mxu0 0.0
    %916 = vmatprep.subr.mxu0 0.0
    %917 = vmatpush1.xpose.msra.mxu0 0.0
    %918 = vmatprep.subr.mxu0 0.0
    %919 = vmatpush1.xpose.msra.mxu0 0.0
    %920 = vmatprep.subr.mxu0 0.0
    %921 = vmatpush1.xpose.msra.mxu0 0.0
    %922 = vmatprep.subr.mxu0 0.0
    %923 = vmatpush1.xpose.msra.mxu0 0.0
    %924 = vmatprep.subr.mxu0 0.0
    %925 = vmatpush1.xpose.msra.mxu0 0.0
    %926 = vmatprep.mubr.f32.mxu0 0.0
    %927 = vmatmul.mubr.f32.gmra.mrb[0].mxu0 %v711
    %v928 = vpop.f32.mrb[0].mxu0
    %v929 = vadd.f32 0.0, %v928
    %v930 = vpop.f32.mrb[0].mxu0
    %931 = vdwg.mxu0
    %v933 = vsel %vm93, %v705, 0
    %935 = vmatprep.subr.mxu0 0.0
    %936 = vmatpush1.xpose.msra.mxu0 %v933
    %937 = vmatprep.subr.mxu0 0.0
    %938 = vmatpush1.xpose.msra.mxu0 0.0
    %939 = vmatprep.subr.mxu0 0.0
    %940 = vmatpush1.xpose.msra.mxu0 0.0
    %941 = vmatprep.subr.mxu0 0.0
    %942 = vmatpush1.xpose.msra.mxu0 0.0
    %943 = vmatprep.subr.mxu0 0.0
    %944 = vmatpush1.xpose.msra.mxu0 0.0
    %945 = vmatprep.subr.mxu0 0.0
    %946 = vmatpush1.xpose.msra.mxu0 0.0
    %947 = vmatprep.subr.mxu0 0.0
    %948 = vmatpush1.xpose.msra.mxu0 0.0
    %949 = vmatprep.subr.mxu0 0.0
    %950 = vmatpush1.xpose.msra.mxu0 0.0
    %951 = vmatprep.subr.mxu0 0.0
    %952 = vmatpush1.xpose.msra.mxu0 0.0
    %953 = vmatprep.subr.mxu0 0.0
    %954 = vmatpush1.xpose.msra.mxu0 0.0
    %955 = vmatprep.subr.mxu0 0.0
    %956 = vmatpush1.xpose.msra.mxu0 0.0
    %957 = vmatprep.subr.mxu0 0.0
    %958 = vmatpush1.xpose.msra.mxu0 0.0
    %959 = vmatprep.subr.mxu0 0.0
    %960 = vmatpush1.xpose.msra.mxu0 0.0
    %961 = vmatprep.subr.mxu0 0.0
    %962 = vmatpush1.xpose.msra.mxu0 0.0
    %963 = vmatprep.subr.mxu0 0.0
    %964 = vmatpush1.xpose.msra.mxu0 0.0
    %965 = vmatprep.subr.mxu0 0.0
    %966 = vmatpush1.xpose.msra.mxu0 0.0
    %967 = vmatprep.subr.mxu0 0.0
    %968 = vmatpush1.xpose.msra.mxu0 0.0
    %969 = vmatprep.subr.mxu0 0.0
    %970 = vmatpush1.xpose.msra.mxu0 0.0
    %971 = vmatprep.subr.mxu0 0.0
    %972 = vmatpush1.xpose.msra.mxu0 0.0
    %973 = vmatprep.subr.mxu0 0.0
    %974 = vmatpush1.xpose.msra.mxu0 0.0
    %975 = vmatprep.subr.mxu0 0.0
    %976 = vmatpush1.xpose.msra.mxu0 0.0
    %977 = vmatprep.subr.mxu0 0.0
    %978 = vmatpush1.xpose.msra.mxu0 0.0
    %979 = vmatprep.subr.mxu0 0.0
    %980 = vmatpush1.xpose.msra.mxu0 0.0
    %981 = vmatprep.subr.mxu0 0.0
    %982 = vmatpush1.xpose.msra.mxu0 0.0
    %983 = vmatprep.subr.mxu0 0.0
    %984 = vmatpush1.xpose.msra.mxu0 0.0
    %985 = vmatprep.subr.mxu0 0.0
    %986 = vmatpush1.xpose.msra.mxu0 0.0
    %987 = vmatprep.subr.mxu0 0.0
    %988 = vmatpush1.xpose.msra.mxu0 0.0
    %989 = vmatprep.subr.mxu0 0.0
    %990 = vmatpush1.xpose.msra.mxu0 0.0
    %991 = vmatprep.subr.mxu0 0.0
    %992 = vmatpush1.xpose.msra.mxu0 0.0
    %993 = vmatprep.subr.mxu0 0.0
    %994 = vmatpush1.xpose.msra.mxu0 0.0
    %995 = vmatprep.subr.mxu0 0.0
    %996 = vmatpush1.xpose.msra.mxu0 0.0
    %997 = vmatprep.subr.mxu0 0.0
    %998 = vmatpush1.xpose.msra.mxu0 0.0
    %999 = vmatprep.mubr.f32.mxu0 0.0
    %1000 = vmatmul.mubr.f32.gmra.mrb[0].mxu0 %v711
    %v1001 = vpop.f32.mrb[0].mxu0
    %v1002 = vadd.f32 0.0, %v1001
    %v1003 = vpop.f32.mrb[0].mxu0
    %1004 = vdwg.mxu0
    %v1006 = vsel %vm93, %v706, 0
    %1008 = vmatprep.subr.mxu0 0.0
    %1009 = vmatpush1.xpose.msra.mxu0 %v1006
    %1010 = vmatprep.subr.mxu0 0.0
    %1011 = vmatpush1.xpose.msra.mxu0 0.0
    %1012 = vmatprep.subr.mxu0 0.0
    %1013 = vmatpush1.xpose.msra.mxu0 0.0
    %1014 = vmatprep.subr.mxu0 0.0
    %1015 = vmatpush1.xpose.msra.mxu0 0.0
    %1016 = vmatprep.subr.mxu0 0.0
    %1017 = vmatpush1.xpose.msra.mxu0 0.0
    %1018 = vmatprep.subr.mxu0 0.0
    %1019 = vmatpush1.xpose.msra.mxu0 0.0
    %1020 = vmatprep.subr.mxu0 0.0
    %1021 = vmatpush1.xpose.msra.mxu0 0.0
    %1022 = vmatprep.subr.mxu0 0.0
    %1023 = vmatpush1.xpose.msra.mxu0 0.0
    %1024 = vmatprep.subr.mxu0 0.0
    %1025 = vmatpush1.xpose.msra.mxu0 0.0
    %1026 = vmatprep.subr.mxu0 0.0
    %1027 = vmatpush1.xpose.msra.mxu0 0.0
    %1028 = vmatprep.subr.mxu0 0.0
    %1029 = vmatpush1.xpose.msra.mxu0 0.0
    %1030 = vmatprep.subr.mxu0 0.0
    %1031 = vmatpush1.xpose.msra.mxu0 0.0
    %1032 = vmatprep.subr.mxu0 0.0
    %1033 = vmatpush1.xpose.msra.mxu0 0.0
    %1034 = vmatprep.subr.mxu0 0.0
    %1035 = vmatpush1.xpose.msra.mxu0 0.0
    %1036 = vmatprep.subr.mxu0 0.0
    %1037 = vmatpush1.xpose.msra.mxu0 0.0
    %1038 = vmatprep.subr.mxu0 0.0
    %1039 = vmatpush1.xpose.msra.mxu0 0.0
    %1040 = vmatprep.subr.mxu0 0.0
    %1041 = vmatpush1.xpose.msra.mxu0 0.0
    %1042 = vmatprep.subr.mxu0 0.0
    %1043 = vmatpush1.xpose.msra.mxu0 0.0
    %1044 = vmatprep.subr.mxu0 0.0
    %1045 = vmatpush1.xpose.msra.mxu0 0.0
    %1046 = vmatprep.subr.mxu0 0.0
    %1047 = vmatpush1.xpose.msra.mxu0 0.0
    %1048 = vmatprep.subr.mxu0 0.0
    %1049 = vmatpush1.xpose.msra.mxu0 0.0
    %1050 = vmatprep.subr.mxu0 0.0
    %1051 = vmatpush1.xpose.msra.mxu0 0.0
    %1052 = vmatprep.subr.mxu0 0.0
    %1053 = vmatpush1.xpose.msra.mxu0 0.0
    %1054 = vmatprep.subr.mxu0 0.0
    %1055 = vmatpush1.xpose.msra.mxu0 0.0
    %1056 = vmatprep.subr.mxu0 0.0
    %1057 = vmatpush1.xpose.msra.mxu0 0.0
    %1058 = vmatprep.subr.mxu0 0.0
    %1059 = vmatpush1.xpose.msra.mxu0 0.0
    %1060 = vmatprep.subr.mxu0 0.0
    %1061 = vmatpush1.xpose.msra.mxu0 0.0
    %1062 = vmatprep.subr.mxu0 0.0
    %1063 = vmatpush1.xpose.msra.mxu0 0.0
    %1064 = vmatprep.subr.mxu0 0.0
    %1065 = vmatpush1.xpose.msra.mxu0 0.0
    %1066 = vmatprep.subr.mxu0 0.0
    %1067 = vmatpush1.xpose.msra.mxu0 0.0
    %1068 = vmatprep.subr.mxu0 0.0
    %1069 = vmatpush1.xpose.msra.mxu0 0.0
    %1070 = vmatprep.subr.mxu0 0.0
    %1071 = vmatpush1.xpose.msra.mxu0 0.0
    %1072 = vmatprep.mubr.f32.mxu0 0.0
    %1073 = vmatmul.mubr.f32.gmra.mrb[0].mxu0 %v711
    %v1074 = vpop.f32.mrb[0].mxu0
    %v1075 = vadd.f32 0.0, %v1074
    %v1076 = vpop.f32.mrb[0].mxu0
    %1077 = vdwg.mxu0
    %v1079 = vsel %vm93, %v707, 0
    %1081 = vmatprep.subr.mxu0 0.0
    %1082 = vmatpush1.xpose.msra.mxu0 %v1079
    %1083 = vmatprep.subr.mxu0 0.0
    %1084 = vmatpush1.xpose.msra.mxu0 0.0
    %1085 = vmatprep.subr.mxu0 0.0
    %1086 = vmatpush1.xpose.msra.mxu0 0.0
    %1087 = vmatprep.subr.mxu0 0.0
    %1088 = vmatpush1.xpose.msra.mxu0 0.0
    %1089 = vmatprep.subr.mxu0 0.0
    %1090 = vmatpush1.xpose.msra.mxu0 0.0
    %1091 = vmatprep.subr.mxu0 0.0
    %1092 = vmatpush1.xpose.msra.mxu0 0.0
    %1093 = vmatprep.subr.mxu0 0.0
    %1094 = vmatpush1.xpose.msra.mxu0 0.0
    %1095 = vmatprep.subr.mxu0 0.0
    %1096 = vmatpush1.xpose.msra.mxu0 0.0
    %1097 = vmatprep.subr.mxu0 0.0
    %1098 = vmatpush1.xpose.msra.mxu0 0.0
    %1099 = vmatprep.subr.mxu0 0.0
    %1100 = vmatpush1.xpose.msra.mxu0 0.0
    %1101 = vmatprep.subr.mxu0 0.0
    %1102 = vmatpush1.xpose.msra.mxu0 0.0
    %1103 = vmatprep.subr.mxu0 0.0
    %1104 = vmatpush1.xpose.msra.mxu0 0.0
    %1105 = vmatprep.subr.mxu0 0.0
    %1106 = vmatpush1.xpose.msra.mxu0 0.0
    %1107 = vmatprep.subr.mxu0 0.0
    %1108 = vmatpush1.xpose.msra.mxu0 0.0
    %1109 = vmatprep.subr.mxu0 0.0
    %1110 = vmatpush1.xpose.msra.mxu0 0.0
    %1111 = vmatprep.subr.mxu0 0.0
    %1112 = vmatpush1.xpose.msra.mxu0 0.0
    %1113 = vmatprep.subr.mxu0 0.0
    %1114 = vmatpush1.xpose.msra.mxu0 0.0
    %1115 = vmatprep.subr.mxu0 0.0
    %1116 = vmatpush1.xpose.msra.mxu0 0.0
    %1117 = vmatprep.subr.mxu0 0.0
    %1118 = vmatpush1.xpose.msra.mxu0 0.0
    %1119 = vmatprep.subr.mxu0 0.0
    %1120 = vmatpush1.xpose.msra.mxu0 0.0
    %1121 = vmatprep.subr.mxu0 0.0
    %1122 = vmatpush1.xpose.msra.mxu0 0.0
    %1123 = vmatprep.subr.mxu0 0.0
    %1124 = vmatpush1.xpose.msra.mxu0 0.0
    %1125 = vmatprep.subr.mxu0 0.0
    %1126 = vmatpush1.xpose.msra.mxu0 0.0
    %1127 = vmatprep.subr.mxu0 0.0
    %1128 = vmatpush1.xpose.msra.mxu0 0.0
    %1129 = vmatprep.subr.mxu0 0.0
    %1130 = vmatpush1.xpose.msra.mxu0 0.0
    %1131 = vmatprep.subr.mxu0 0.0
    %1132 = vmatpush1.xpose.msra.mxu0 0.0
    %1133 = vmatprep.subr.mxu0 0.0
    %1134 = vmatpush1.xpose.msra.mxu0 0.0
    %1135 = vmatprep.subr.mxu0 0.0
    %1136 = vmatpush1.xpose.msra.mxu0 0.0
    %1137 = vmatprep.subr.mxu0 0.0
    %1138 = vmatpush1.xpose.msra.mxu0 0.0
    %1139 = vmatprep.subr.mxu0 0.0
    %1140 = vmatpush1.xpose.msra.mxu0 0.0
    %1141 = vmatprep.subr.mxu0 0.0
    %1142 = vmatpush1.xpose.msra.mxu0 0.0
    %1143 = vmatprep.subr.mxu0 0.0
    %1144 = vmatpush1.xpose.msra.mxu0 0.0
    %1145 = vmatprep.mubr.f32.mxu0 0.0
    %1146 = vmatmul.mubr.f32.gmra.mrb[0].mxu0 %v711
    %v1147 = vpop.f32.mrb[0].mxu0
    %v1148 = vadd.f32 0.0, %v1147
    %v1149 = vpop.f32.mrb[0].mxu0
    %1150 = vdwg.mxu0
    %v1152 = vsel %vm93, %v708, 0
    %1154 = vmatprep.subr.mxu0 0.0
    %1155 = vmatpush1.xpose.msra.mxu0 %v1152
    %1156 = vmatprep.subr.mxu0 0.0
    %1157 = vmatpush1.xpose.msra.mxu0 0.0
    %1158 = vmatprep.subr.mxu0 0.0
    %1159 = vmatpush1.xpose.msra.mxu0 0.0
    %1160 = vmatprep.subr.mxu0 0.0
    %1161 = vmatpush1.xpose.msra.mxu0 0.0
    %1162 = vmatprep.subr.mxu0 0.0
    %1163 = vmatpush1.xpose.msra.mxu0 0.0
    %1164 = vmatprep.subr.mxu0 0.0
    %1165 = vmatpush1.xpose.msra.mxu0 0.0
    %1166 = vmatprep.subr.mxu0 0.0
    %1167 = vmatpush1.xpose.msra.mxu0 0.0
    %1168 = vmatprep.subr.mxu0 0.0
    %1169 = vmatpush1.xpose.msra.mxu0 0.0
    %1170 = vmatprep.subr.mxu0 0.0
    %1171 = vmatpush1.xpose.msra.mxu0 0.0
    %1172 = vmatprep.subr.mxu0 0.0
    %1173 = vmatpush1.xpose.msra.mxu0 0.0
    %1174 = vmatprep.subr.mxu0 0.0
    %1175 = vmatpush1.xpose.msra.mxu0 0.0
    %1176 = vmatprep.subr.mxu0 0.0
    %1177 = vmatpush1.xpose.msra.mxu0 0.0
    %1178 = vmatprep.subr.mxu0 0.0
    %1179 = vmatpush1.xpose.msra.mxu0 0.0
    %1180 = vmatprep.subr.mxu0 0.0
    %1181 = vmatpush1.xpose.msra.mxu0 0.0
    %1182 = vmatprep.subr.mxu0 0.0
    %1183 = vmatpush1.xpose.msra.mxu0 0.0
    %1184 = vmatprep.subr.mxu0 0.0
    %1185 = vmatpush1.xpose.msra.mxu0 0.0
    %1186 = vmatprep.subr.mxu0 0.0
    %1187 = vmatpush1.xpose.msra.mxu0 0.0
    %1188 = vmatprep.subr.mxu0 0.0
    %1189 = vmatpush1.xpose.msra.mxu0 0.0
    %1190 = vmatprep.subr.mxu0 0.0
    %1191 = vmatpush1.xpose.msra.mxu0 0.0
    %1192 = vmatprep.subr.mxu0 0.0
    %1193 = vmatpush1.xpose.msra.mxu0 0.0
    %1194 = vmatprep.subr.mxu0 0.0
    %1195 = vmatpush1.xpose.msra.mxu0 0.0
    %1196 = vmatprep.subr.mxu0 0.0
    %1197 = vmatpush1.xpose.msra.mxu0 0.0
    %1198 = vmatprep.subr.mxu0 0.0
    %1199 = vmatpush1.xpose.msra.mxu0 0.0
    %1200 = vmatprep.subr.mxu0 0.0
    %1201 = vmatpush1.xpose.msra.mxu0 0.0
    %1202 = vmatprep.subr.mxu0 0.0
    %1203 = vmatpush1.xpose.msra.mxu0 0.0
    %1204 = vmatprep.subr.mxu0 0.0
    %1205 = vmatpush1.xpose.msra.mxu0 0.0
    %1206 = vmatprep.subr.mxu0 0.0
    %1207 = vmatpush1.xpose.msra.mxu0 0.0
    %1208 = vmatprep.subr.mxu0 0.0
    %1209 = vmatpush1.xpose.msra.mxu0 0.0
    %1210 = vmatprep.subr.mxu0 0.0
    %1211 = vmatpush1.xpose.msra.mxu0 0.0
    %1212 = vmatprep.subr.mxu0 0.0
    %1213 = vmatpush1.xpose.msra.mxu0 0.0
    %1214 = vmatprep.subr.mxu0 0.0
    %1215 = vmatpush1.xpose.msra.mxu0 0.0
    %1216 = vmatprep.subr.mxu0 0.0
    %1217 = vmatpush1.xpose.msra.mxu0 0.0
    %1218 = vmatprep.mubr.f32.mxu0 0.0
    %1219 = vmatmul.mubr.f32.gmra.mrb[0].mxu0 %v711
    %v1220 = vpop.f32.mrb[0].mxu0
    %v1221 = vadd.f32 0.0, %v1220
    %v1222 = vpop.f32.mrb[0].mxu0
    %1223 = vdwg.mxu0
    %v1225 = vsel %vm93, %v709, 0
    %1227 = vmatprep.subr.mxu0 0.0
    %1228 = vmatpush1.xpose.msra.mxu0 %v1225
    %1229 = vmatprep.subr.mxu0 0.0
    %1230 = vmatpush1.xpose.msra.mxu0 0.0
    %1231 = vmatprep.subr.mxu0 0.0
    %1232 = vmatpush1.xpose.msra.mxu0 0.0
    %1233 = vmatprep.subr.mxu0 0.0
    %1234 = vmatpush1.xpose.msra.mxu0 0.0
    %1235 = vmatprep.subr.mxu0 0.0
    %1236 = vmatpush1.xpose.msra.mxu0 0.0
    %1237 = vmatprep.subr.mxu0 0.0
    %1238 = vmatpush1.xpose.msra.mxu0 0.0
    %1239 = vmatprep.subr.mxu0 0.0
    %1240 = vmatpush1.xpose.msra.mxu0 0.0
    %1241 = vmatprep.subr.mxu0 0.0
    %1242 = vmatpush1.xpose.msra.mxu0 0.0
    %1243 = vmatprep.subr.mxu0 0.0
    %1244 = vmatpush1.xpose.msra.mxu0 0.0
    %1245 = vmatprep.subr.mxu0 0.0
    %1246 = vmatpush1.xpose.msra.mxu0 0.0
    %1247 = vmatprep.subr.mxu0 0.0
    %1248 = vmatpush1.xpose.msra.mxu0 0.0
    %1249 = vmatprep.subr.mxu0 0.0
    %1250 = vmatpush1.xpose.msra.mxu0 0.0
    %1251 = vmatprep.subr.mxu0 0.0
    %1252 = vmatpush1.xpose.msra.mxu0 0.0
    %1253 = vmatprep.subr.mxu0 0.0
    %1254 = vmatpush1.xpose.msra.mxu0 0.0
    %1255 = vmatprep.subr.mxu0 0.0
    %1256 = vmatpush1.xpose.msra.mxu0 0.0
    %1257 = vmatprep.subr.mxu0 0.0
    %1258 = vmatpush1.xpose.msra.mxu0 0.0
    %1259 = vmatprep.subr.mxu0 0.0
    %1260 = vmatpush1.xpose.msra.mxu0 0.0
    %1261 = vmatprep.subr.mxu0 0.0
    %1262 = vmatpush1.xpose.msra.mxu0 0.0
    %1263 = vmatprep.subr.mxu0 0.0
    %1264 = vmatpush1.xpose.msra.mxu0 0.0
    %1265 = vmatprep.subr.mxu0 0.0
    %1266 = vmatpush1.xpose.msra.mxu0 0.0
    %1267 = vmatprep.subr.mxu0 0.0
    %1268 = vmatpush1.xpose.msra.mxu0 0.0
    %1269 = vmatprep.subr.mxu0 0.0
    %1270 = vmatpush1.xpose.msra.mxu0 0.0
    %1271 = vmatprep.subr.mxu0 0.0
    %1272 = vmatpush1.xpose.msra.mxu0 0.0
    %1273 = vmatprep.subr.mxu0 0.0
    %1274 = vmatpush1.xpose.msra.mxu0 0.0
    %1275 = vmatprep.subr.mxu0 0.0
    %1276 = vmatpush1.xpose.msra.mxu0 0.0
    %1277 = vmatprep.subr.mxu0 0.0
    %1278 = vmatpush1.xpose.msra.mxu0 0.0
    %1279 = vmatprep.subr.mxu0 0.0
    %1280 = vmatpush1.xpose.msra.mxu0 0.0
    %1281 = vmatprep.subr.mxu0 0.0
    %1282 = vmatpush1.xpose.msra.mxu0 0.0
    %1283 = vmatprep.subr.mxu0 0.0
    %1284 = vmatpush1.xpose.msra.mxu0 0.0
    %1285 = vmatprep.subr.mxu0 0.0
    %1286 = vmatpush1.xpose.msra.mxu0 0.0
    %1287 = vmatprep.subr.mxu0 0.0
    %1288 = vmatpush1.xpose.msra.mxu0 0.0
    %1289 = vmatprep.subr.mxu0 0.0
    %1290 = vmatpush1.xpose.msra.mxu0 0.0
    %1291 = vmatprep.mubr.f32.mxu0 0.0
    %1292 = vmatmul.mubr.f32.gmra.mrb[0].mxu0 %v711
    %v1293 = vpop.f32.mrb[0].mxu0
    %v1294 = vadd.f32 0.0, %v1293
    %v1295 = vpop.f32.mrb[0].mxu0
    %1296 = vdwg.mxu0
    %v1297 = vmul.f32 %v69, %v69
    %v1298 = vmul.f32 %v70, %v70
    %v1299 = vmul.f32 %v71, %v71
    %v1300 = vmul.f32 %v72, %v72
    %v1301 = vmul.f32 %v73, %v73
    %v1302 = vmul.f32 %v74, %v74
    %v1303 = vmul.f32 %v75, %v75
    %v1304 = vmul.f32 %v76, %v76
    %vm1305 = vcmask 253952
    %v1306 = vsel %vm1305, %v1297, 0.0
    %1307 = vadd.xlane.f32.xlu0 %v1306
    %v1308 = vpop.xlane.xlu0 %1307
    %v1309 = vsel %vm1305, %v1298, 0.0
    %1310 = vadd.xlane.f32.xlu0 %v1309
    %v1311 = vpop.xlane.xlu0 %1310
    %v1312 = vsel %vm1305, %v1299, 0.0
    %1313 = vadd.xlane.f32.xlu0 %v1312
    %v1314 = vpop.xlane.xlu0 %1313
    %v1315 = vsel %vm1305, %v1300, 0.0
    %1316 = vadd.xlane.f32.xlu0 %v1315
    %v1317 = vpop.xlane.xlu0 %1316
    %v1318 = vsel %vm1305, %v1301, 0.0
    %1319 = vadd.xlane.f32.xlu0 %v1318
    %v1320 = vpop.xlane.xlu0 %1319
    %v1321 = vsel %vm1305, %v1302, 0.0
    %1322 = vadd.xlane.f32.xlu0 %v1321
    %v1323 = vpop.xlane.xlu0 %1322
    %v1324 = vsel %vm1305, %v1303, 0.0
    %1325 = vadd.xlane.f32.xlu0 %v1324
    %v1326 = vpop.xlane.xlu0 %1325
    %v1327 = vsel %vm1305, %v1304, 0.0
    %1328 = vadd.xlane.f32.xlu0 %v1327
    %v1329 = vpop.xlane.xlu0 %1328
    %v1330 = vmul.f32 %v1308, %v783
    %v1331 = vmul.f32 %v1311, %v856
    %v1332 = vmul.f32 %v1314, %v929
    %v1333 = vmul.f32 %v1317, %v1002
    %v1334 = vmul.f32 %v1320, %v1075
    %v1335 = vmul.f32 %v1323, %v1148
    %v1336 = vmul.f32 %v1326, %v1221
    %v1337 = vmul.f32 %v1329, %v1294
    %v1338 = vmax.f32 %v1330, 1e-12
    %v1339 = vmax.f32 %v1331, 1e-12
    %v1340 = vmax.f32 %v1332, 1e-12
    %v1341 = vmax.f32 %v1333, 1e-12
    %v1342 = vmax.f32 %v1334, 1e-12
    %v1343 = vmax.f32 %v1335, 1e-12
    %v1344 = vmax.f32 %v1336, 1e-12
    %v1345 = vmax.f32 %v1337, 1e-12
    %v1346 = vrsqrt.pop %v1338
    %v1347 = vrsqrt.pop %v1339
    %v1348 = vrsqrt.pop %v1340
    %v1349 = vrsqrt.pop %v1341
    %v1350 = vrsqrt.pop %v1342
    %v1351 = vrsqrt.pop %v1343
    %v1352 = vrsqrt.pop %v1344
    %v1353 = vrsqrt.pop %v1345
    %v1354 = vmul.f32 %v167, %v1346
    %v1355 = vmul.f32 %v243, %v1347
    %v1356 = vmul.f32 %v319, %v1348
    %v1357 = vmul.f32 %v395, %v1349
    %v1358 = vmul.f32 %v471, %v1350
    %v1359 = vmul.f32 %v547, %v1351
    %v1360 = vmul.f32 %v623, %v1352
    %v1361 = vmul.f32 %v699, %v1353
    %v1362 = vld [vmem:[#allocation2] sm:$0x1]
    %v1363 = vld [vmem:[#allocation2 + $0x1] sm:$0x1]
    %v1364 = vld [vmem:[#allocation2 + $0x2] sm:$0x1]
    %v1365 = vld [vmem:[#allocation2 + $0x3] sm:$0x1]
    %v1366 = vld [vmem:[#allocation2 + $0x4] sm:$0x1]
    %v1367 = vld [vmem:[#allocation2 + $0x5] sm:$0x1]
    %v1368 = vld [vmem:[#allocation2 + $0x6] sm:$0x1]
    %v1369 = vld [vmem:[#allocation2 + $0x7] sm:$0x1]
    %vm1370 = vcmask 64512
    %v1372 = vsel %vm1370, %v1354, 0
    %1374 = vmatprep.subr.mxu0 0.0
    %1375 = vmatpush1.msra.mxu0 %v85
    %1376 = vmatprep.subr.mxu0 0.0
    %1377 = vmatpush1.msra.mxu0 0.0
    %1378 = vmatprep.subr.mxu0 0.0
    %1379 = vmatpush1.msra.mxu0 0.0
    %1380 = vmatprep.subr.mxu0 0.0
    %1381 = vmatpush1.msra.mxu0 0.0
    %1382 = vmatprep.subr.mxu0 0.0
    %1383 = vmatpush1.msra.mxu0 0.0
    %1384 = vmatprep.subr.mxu0 0.0
    %1385 = vmatpush1.msra.mxu0 0.0
    %1386 = vmatprep.subr.mxu0 0.0
    %1387 = vmatpush1.msra.mxu0 0.0
    %1388 = vmatprep.subr.mxu0 0.0
    %1389 = vmatpush1.msra.mxu0 0.0
    %1390 = vmatprep.subr.mxu0 0.0
    %1391 = vmatpush1.msra.mxu0 0.0
    %1392 = vmatprep.subr.mxu0 0.0
    %1393 = vmatpush1.msra.mxu0 0.0
    %1394 = vmatprep.subr.mxu0 0.0
    %1395 = vmatpush1.msra.mxu0 0.0
    %1396 = vmatprep.subr.mxu0 0.0
    %1397 = vmatpush1.msra.mxu0 0.0
    %1398 = vmatprep.subr.mxu0 0.0
    %1399 = vmatpush1.msra.mxu0 0.0
    %1400 = vmatprep.subr.mxu0 0.0
    %1401 = vmatpush1.msra.mxu0 0.0
    %1402 = vmatprep.subr.mxu0 0.0
    %1403 = vmatpush1.msra.mxu0 0.0
    %1404 = vmatprep.subr.mxu0 0.0
    %1405 = vmatpush1.msra.mxu0 0.0
    %1406 = vmatprep.subr.mxu0 0.0
    %1407 = vmatpush1.msra.mxu0 0.0
    %1408 = vmatprep.subr.mxu0 0.0
    %1409 = vmatpush1.msra.mxu0 0.0
    %1410 = vmatprep.subr.mxu0 0.0
    %1411 = vmatpush1.msra.mxu0 0.0
    %1412 = vmatprep.subr.mxu0 0.0
    %1413 = vmatpush1.msra.mxu0 0.0
    %1414 = vmatprep.subr.mxu0 0.0
    %1415 = vmatpush1.msra.mxu0 0.0
    %1416 = vmatprep.subr.mxu0 0.0
    %1417 = vmatpush1.msra.mxu0 0.0
    %1418 = vmatprep.subr.mxu0 0.0
    %1419 = vmatpush1.msra.mxu0 0.0
    %1420 = vmatprep.subr.mxu0 0.0
    %1421 = vmatpush1.msra.mxu0 0.0
    %1422 = vmatprep.subr.mxu0 0.0
    %1423 = vmatpush1.msra.mxu0 0.0
    %1424 = vmatprep.subr.mxu0 0.0
    %1425 = vmatpush1.msra.mxu0 0.0
    %1426 = vmatprep.subr.mxu0 0.0
    %1427 = vmatpush1.msra.mxu0 0.0
    %1428 = vmatprep.subr.mxu0 0.0
    %1429 = vmatpush1.msra.mxu0 0.0
    %1430 = vmatprep.subr.mxu0 0.0
    %1431 = vmatpush1.msra.mxu0 0.0
    %1432 = vmatprep.subr.mxu0 0.0
    %1433 = vmatpush1.msra.mxu0 0.0
    %1434 = vmatprep.subr.mxu0 0.0
    %1435 = vmatpush1.msra.mxu0 0.0
    %1436 = vmatprep.subr.mxu0 0.0
    %1437 = vmatpush1.msra.mxu0 0.0
    %1438 = vmatprep.mubr.f32.mxu0 0.0
    %1439 = vmatmul.mubr.f32.gmra.mrb[0].mxu0 %v1372
    %v1440 = vpop.f32.mrb[0].mxu0
    %v1441 = vadd.f32 0.0, %v1440
    %v1442 = vpop.f32.mrb[0].mxu0
    %1443 = vdwg.mxu0
    %v1445 = vsel %vm1370, %v1355, 0
    %1447 = vmatprep.subr.mxu0 0.0
    %1448 = vmatpush1.msra.mxu0 %v86
    %1449 = vmatprep.subr.mxu0 0.0
    %1450 = vmatpush1.msra.mxu0 0.0
    %1451 = vmatprep.subr.mxu0 0.0
    %1452 = vmatpush1.msra.mxu0 0.0
    %1453 = vmatprep.subr.mxu0 0.0
    %1454 = vmatpush1.msra.mxu0 0.0
    %1455 = vmatprep.subr.mxu0 0.0
    %1456 = vmatpush1.msra.mxu0 0.0
    %1457 = vmatprep.subr.mxu0 0.0
    %1458 = vmatpush1.msra.mxu0 0.0
    %1459 = vmatprep.subr.mxu0 0.0
    %1460 = vmatpush1.msra.mxu0 0.0
    %1461 = vmatprep.subr.mxu0 0.0
    %1462 = vmatpush1.msra.mxu0 0.0
    %1463 = vmatprep.subr.mxu0 0.0
    %1464 = vmatpush1.msra.mxu0 0.0
    %1465 = vmatprep.subr.mxu0 0.0
    %1466 = vmatpush1.msra.mxu0 0.0
    %1467 = vmatprep.subr.mxu0 0.0
    %1468 = vmatpush1.msra.mxu0 0.0
    %1469 = vmatprep.subr.mxu0 0.0
    %1470 = vmatpush1.msra.mxu0 0.0
    %1471 = vmatprep.subr.mxu0 0.0
    %1472 = vmatpush1.msra.mxu0 0.0
    %1473 = vmatprep.subr.mxu0 0.0
    %1474 = vmatpush1.msra.mxu0 0.0
    %1475 = vmatprep.subr.mxu0 0.0
    %1476 = vmatpush1.msra.mxu0 0.0
    %1477 = vmatprep.subr.mxu0 0.0
    %1478 = vmatpush1.msra.mxu0 0.0
    %1479 = vmatprep.subr.mxu0 0.0
    %1480 = vmatpush1.msra.mxu0 0.0
    %1481 = vmatprep.subr.mxu0 0.0
    %1482 = vmatpush1.msra.mxu0 0.0
    %1483 = vmatprep.subr.mxu0 0.0
    %1484 = vmatpush1.msra.mxu0 0.0
    %1485 = vmatprep.subr.mxu0 0.0
    %1486 = vmatpush1.msra.mxu0 0.0
    %1487 = vmatprep.subr.mxu0 0.0
    %1488 = vmatpush1.msra.mxu0 0.0
    %1489 = vmatprep.subr.mxu0 0.0
    %1490 = vmatpush1.msra.mxu0 0.0
    %1491 = vmatprep.subr.mxu0 0.0
    %1492 = vmatpush1.msra.mxu0 0.0
    %1493 = vmatprep.subr.mxu0 0.0
    %1494 = vmatpush1.msra.mxu0 0.0
    %1495 = vmatprep.subr.mxu0 0.0
    %1496 = vmatpush1.msra.mxu0 0.0
    %1497 = vmatprep.subr.mxu0 0.0
    %1498 = vmatpush1.msra.mxu0 0.0
    %1499 = vmatprep.subr.mxu0 0.0
    %1500 = vmatpush1.msra.mxu0 0.0
    %1501 = vmatprep.subr.mxu0 0.0
    %1502 = vmatpush1.msra.mxu0 0.0
    %1503 = vmatprep.subr.mxu0 0.0
    %1504 = vmatpush1.msra.mxu0 0.0
    %1505 = vmatprep.subr.mxu0 0.0
    %1506 = vmatpush1.msra.mxu0 0.0
    %1507 = vmatprep.subr.mxu0 0.0
    %1508 = vmatpush1.msra.mxu0 0.0
    %1509 = vmatprep.subr.mxu0 0.0
    %1510 = vmatpush1.msra.mxu0 0.0
    %1511 = vmatprep.mubr.f32.mxu0 0.0
    %1512 = vmatmul.mubr.f32.gmra.mrb[0].mxu0 %v1445
    %v1513 = vpop.f32.mrb[0].mxu0
    %v1514 = vadd.f32 0.0, %v1513
    %v1515 = vpop.f32.mrb[0].mxu0
    %1516 = vdwg.mxu0
    %v1518 = vsel %vm1370, %v1356, 0
    %1520 = vmatprep.subr.mxu0 0.0
    %1521 = vmatpush1.msra.mxu0 %v87
    %1522 = vmatprep.subr.mxu0 0.0
    %1523 = vmatpush1.msra.mxu0 0.0
    %1524 = vmatprep.subr.mxu0 0.0
    %1525 = vmatpush1.msra.mxu0 0.0
    %1526 = vmatprep.subr.mxu0 0.0
    %1527 = vmatpush1.msra.mxu0 0.0
    %1528 = vmatprep.subr.mxu0 0.0
    %1529 = vmatpush1.msra.mxu0 0.0
    %1530 = vmatprep.subr.mxu0 0.0
    %1531 = vmatpush1.msra.mxu0 0.0
    %1532 = vmatprep.subr.mxu0 0.0
    %1533 = vmatpush1.msra.mxu0 0.0
    %1534 = vmatprep.subr.mxu0 0.0
    %1535 = vmatpush1.msra.mxu0 0.0
    %1536 = vmatprep.subr.mxu0 0.0
    %1537 = vmatpush1.msra.mxu0 0.0
    %1538 = vmatprep.subr.mxu0 0.0
    %1539 = vmatpush1.msra.mxu0 0.0
    %1540 = vmatprep.subr.mxu0 0.0
    %1541 = vmatpush1.msra.mxu0 0.0
    %1542 = vmatprep.subr.mxu0 0.0
    %1543 = vmatpush1.msra.mxu0 0.0
    %1544 = vmatprep.subr.mxu0 0.0
    %1545 = vmatpush1.msra.mxu0 0.0
    %1546 = vmatprep.subr.mxu0 0.0
    %1547 = vmatpush1.msra.mxu0 0.0
    %1548 = vmatprep.subr.mxu0 0.0
    %1549 = vmatpush1.msra.mxu0 0.0
    %1550 = vmatprep.subr.mxu0 0.0
    %1551 = vmatpush1.msra.mxu0 0.0
    %1552 = vmatprep.subr.mxu0 0.0
    %1553 = vmatpush1.msra.mxu0 0.0
    %1554 = vmatprep.subr.mxu0 0.0
    %1555 = vmatpush1.msra.mxu0 0.0
    %1556 = vmatprep.subr.mxu0 0.0
    %1557 = vmatpush1.msra.mxu0 0.0
    %1558 = vmatprep.subr.mxu0 0.0
    %1559 = vmatpush1.msra.mxu0 0.0
    %1560 = vmatprep.subr.mxu0 0.0
    %1561 = vmatpush1.msra.mxu0 0.0
    %1562 = vmatprep.subr.mxu0 0.0
    %1563 = vmatpush1.msra.mxu0 0.0
    %1564 = vmatprep.subr.mxu0 0.0
    %1565 = vmatpush1.msra.mxu0 0.0
    %1566 = vmatprep.subr.mxu0 0.0
    %1567 = vmatpush1.msra.mxu0 0.0
    %1568 = vmatprep.subr.mxu0 0.0
    %1569 = vmatpush1.msra.mxu0 0.0
    %1570 = vmatprep.subr.mxu0 0.0
    %1571 = vmatpush1.msra.mxu0 0.0
    %1572 = vmatprep.subr.mxu0 0.0
    %1573 = vmatpush1.msra.mxu0 0.0
    %1574 = vmatprep.subr.mxu0 0.0
    %1575 = vmatpush1.msra.mxu0 0.0
    %1576 = vmatprep.subr.mxu0 0.0
    %1577 = vmatpush1.msra.mxu0 0.0
    %1578 = vmatprep.subr.mxu0 0.0
    %1579 = vmatpush1.msra.mxu0 0.0
    %1580 = vmatprep.subr.mxu0 0.0
    %1581 = vmatpush1.msra.mxu0 0.0
    %1582 = vmatprep.subr.mxu0 0.0
    %1583 = vmatpush1.msra.mxu0 0.0
    %1584 = vmatprep.mubr.f32.mxu0 0.0
    %1585 = vmatmul.mubr.f32.gmra.mrb[0].mxu0 %v1518
    %v1586 = vpop.f32.mrb[0].mxu0
    %v1587 = vadd.f32 0.0, %v1586
    %v1588 = vpop.f32.mrb[0].mxu0
    %1589 = vdwg.mxu0
    %v1591 = vsel %vm1370, %v1357, 0
    %1593 = vmatprep.subr.mxu0 0.0
    %1594 = vmatpush1.msra.mxu0 %v88
    %1595 = vmatprep.subr.mxu0 0.0
    %1596 = vmatpush1.msra.mxu0 0.0
    %1597 = vmatprep.subr.mxu0 0.0
    %1598 = vmatpush1.msra.mxu0 0.0
    %1599 = vmatprep.subr.mxu0 0.0
    %1600 = vmatpush1.msra.mxu0 0.0
    %1601 = vmatprep.subr.mxu0 0.0
    %1602 = vmatpush1.msra.mxu0 0.0
    %1603 = vmatprep.subr.mxu0 0.0
    %1604 = vmatpush1.msra.mxu0 0.0
    %1605 = vmatprep.subr.mxu0 0.0
    %1606 = vmatpush1.msra.mxu0 0.0
    %1607 = vmatprep.subr.mxu0 0.0
    %1608 = vmatpush1.msra.mxu0 0.0
    %1609 = vmatprep.subr.mxu0 0.0
    %1610 = vmatpush1.msra.mxu0 0.0
    %1611 = vmatprep.subr.mxu0 0.0
    %1612 = vmatpush1.msra.mxu0 0.0
    %1613 = vmatprep.subr.mxu0 0.0
    %1614 = vmatpush1.msra.mxu0 0.0
    %1615 = vmatprep.subr.mxu0 0.0
    %1616 = vmatpush1.msra.mxu0 0.0
    %1617 = vmatprep.subr.mxu0 0.0
    %1618 = vmatpush1.msra.mxu0 0.0
    %1619 = vmatprep.subr.mxu0 0.0
    %1620 = vmatpush1.msra.mxu0 0.0
    %1621 = vmatprep.subr.mxu0 0.0
    %1622 = vmatpush1.msra.mxu0 0.0
    %1623 = vmatprep.subr.mxu0 0.0
    %1624 = vmatpush1.msra.mxu0 0.0
    %1625 = vmatprep.subr.mxu0 0.0
    %1626 = vmatpush1.msra.mxu0 0.0
    %1627 = vmatprep.subr.mxu0 0.0
    %1628 = vmatpush1.msra.mxu0 0.0
    %1629 = vmatprep.subr.mxu0 0.0
    %1630 = vmatpush1.msra.mxu0 0.0
    %1631 = vmatprep.subr.mxu0 0.0
    %1632 = vmatpush1.msra.mxu0 0.0
    %1633 = vmatprep.subr.mxu0 0.0
    %1634 = vmatpush1.msra.mxu0 0.0
    %1635 = vmatprep.subr.mxu0 0.0
    %1636 = vmatpush1.msra.mxu0 0.0
    %1637 = vmatprep.subr.mxu0 0.0
    %1638 = vmatpush1.msra.mxu0 0.0
    %1639 = vmatprep.subr.mxu0 0.0
    %1640 = vmatpush1.msra.mxu0 0.0
    %1641 = vmatprep.subr.mxu0 0.0
    %1642 = vmatpush1.msra.mxu0 0.0
    %1643 = vmatprep.subr.mxu0 0.0
    %1644 = vmatpush1.msra.mxu0 0.0
    %1645 = vmatprep.subr.mxu0 0.0
    %1646 = vmatpush1.msra.mxu0 0.0
    %1647 = vmatprep.subr.mxu0 0.0
    %1648 = vmatpush1.msra.mxu0 0.0
    %1649 = vmatprep.subr.mxu0 0.0
    %1650 = vmatpush1.msra.mxu0 0.0
    %1651 = vmatprep.subr.mxu0 0.0
    %1652 = vmatpush1.msra.mxu0 0.0
    %1653 = vmatprep.subr.mxu0 0.0
    %1654 = vmatpush1.msra.mxu0 0.0
    %1655 = vmatprep.subr.mxu0 0.0
    %1656 = vmatpush1.msra.mxu0 0.0
    %1657 = vmatprep.mubr.f32.mxu0 0.0
    %1658 = vmatmul.mubr.f32.gmra.mrb[0].mxu0 %v1591
    %v1659 = vpop.f32.mrb[0].mxu0
    %v1660 = vadd.f32 0.0, %v1659
    %v1661 = vpop.f32.mrb[0].mxu0
    %1662 = vdwg.mxu0
    %v1664 = vsel %vm1370, %v1358, 0
    %1666 = vmatprep.subr.mxu0 0.0
    %1667 = vmatpush1.msra.mxu0 %v89
    %1668 = vmatprep.subr.mxu0 0.0
    %1669 = vmatpush1.msra.mxu0 0.0
    %1670 = vmatprep.subr.mxu0 0.0
    %1671 = vmatpush1.msra.mxu0 0.0
    %1672 = vmatprep.subr.mxu0 0.0
    %1673 = vmatpush1.msra.mxu0 0.0
    %1674 = vmatprep.subr.mxu0 0.0
    %1675 = vmatpush1.msra.mxu0 0.0
    %1676 = vmatprep.subr.mxu0 0.0
    %1677 = vmatpush1.msra.mxu0 0.0
    %1678 = vmatprep.subr.mxu0 0.0
    %1679 = vmatpush1.msra.mxu0 0.0
    %1680 = vmatprep.subr.mxu0 0.0
    %1681 = vmatpush1.msra.mxu0 0.0
    %1682 = vmatprep.subr.mxu0 0.0
    %1683 = vmatpush1.msra.mxu0 0.0
    %1684 = vmatprep.subr.mxu0 0.0
    %1685 = vmatpush1.msra.mxu0 0.0
    %1686 = vmatprep.subr.mxu0 0.0
    %1687 = vmatpush1.msra.mxu0 0.0
    %1688 = vmatprep.subr.mxu0 0.0
    %1689 = vmatpush1.msra.mxu0 0.0
    %1690 = vmatprep.subr.mxu0 0.0
    %1691 = vmatpush1.msra.mxu0 0.0
    %1692 = vmatprep.subr.mxu0 0.0
    %1693 = vmatpush1.msra.mxu0 0.0
    %1694 = vmatprep.subr.mxu0 0.0
    %1695 = vmatpush1.msra.mxu0 0.0
    %1696 = vmatprep.subr.mxu0 0.0
    %1697 = vmatpush1.msra.mxu0 0.0
    %1698 = vmatprep.subr.mxu0 0.0
    %1699 = vmatpush1.msra.mxu0 0.0
    %1700 = vmatprep.subr.mxu0 0.0
    %1701 = vmatpush1.msra.mxu0 0.0
    %1702 = vmatprep.subr.mxu0 0.0
    %1703 = vmatpush1.msra.mxu0 0.0
    %1704 = vmatprep.subr.mxu0 0.0
    %1705 = vmatpush1.msra.mxu0 0.0
    %1706 = vmatprep.subr.mxu0 0.0
    %1707 = vmatpush1.msra.mxu0 0.0
    %1708 = vmatprep.subr.mxu0 0.0
    %1709 = vmatpush1.msra.mxu0 0.0
    %1710 = vmatprep.subr.mxu0 0.0
    %1711 = vmatpush1.msra.mxu0 0.0
    %1712 = vmatprep.subr.mxu0 0.0
    %1713 = vmatpush1.msra.mxu0 0.0
    %1714 = vmatprep.subr.mxu0 0.0
    %1715 = vmatpush1.msra.mxu0 0.0
    %1716 = vmatprep.subr.mxu0 0.0
    %1717 = vmatpush1.msra.mxu0 0.0
    %1718 = vmatprep.subr.mxu0 0.0
    %1719 = vmatpush1.msra.mxu0 0.0
    %1720 = vmatprep.subr.mxu0 0.0
    %1721 = vmatpush1.msra.mxu0 0.0
    %1722 = vmatprep.subr.mxu0 0.0
    %1723 = vmatpush1.msra.mxu0 0.0
    %1724 = vmatprep.subr.mxu0 0.0
    %1725 = vmatpush1.msra.mxu0 0.0
    %1726 = vmatprep.subr.mxu0 0.0
    %1727 = vmatpush1.msra.mxu0 0.0
    %1728 = vmatprep.subr.mxu0 0.0
    %1729 = vmatpush1.msra.mxu0 0.0
    %1730 = vmatprep.mubr.f32.mxu0 0.0
    %1731 = vmatmul.mubr.f32.gmra.mrb[0].mxu0 %v1664
    %v1732 = vpop.f32.mrb[0].mxu0
    %v1733 = vadd.f32 0.0, %v1732
    %v1734 = vpop.f32.mrb[0].mxu0
    %1735 = vdwg.mxu0
    %v1737 = vsel %vm1370, %v1359, 0
    %1739 = vmatprep.subr.mxu0 0.0
    %1740 = vmatpush1.msra.mxu0 %v90
    %1741 = vmatprep.subr.mxu0 0.0
    %1742 = vmatpush1.msra.mxu0 0.0
    %1743 = vmatprep.subr.mxu0 0.0
    %1744 = vmatpush1.msra.mxu0 0.0
    %1745 = vmatprep.subr.mxu0 0.0
    %1746 = vmatpush1.msra.mxu0 0.0
    %1747 = vmatprep.subr.mxu0 0.0
    %1748 = vmatpush1.msra.mxu0 0.0
    %1749 = vmatprep.subr.mxu0 0.0
    %1750 = vmatpush1.msra.mxu0 0.0
    %1751 = vmatprep.subr.mxu0 0.0
    %1752 = vmatpush1.msra.mxu0 0.0
    %1753 = vmatprep.subr.mxu0 0.0
    %1754 = vmatpush1.msra.mxu0 0.0
    %1755 = vmatprep.subr.mxu0 0.0
    %1756 = vmatpush1.msra.mxu0 0.0
    %1757 = vmatprep.subr.mxu0 0.0
    %1758 = vmatpush1.msra.mxu0 0.0
    %1759 = vmatprep.subr.mxu0 0.0
    %1760 = vmatpush1.msra.mxu0 0.0
    %1761 = vmatprep.subr.mxu0 0.0
    %1762 = vmatpush1.msra.mxu0 0.0
    %1763 = vmatprep.subr.mxu0 0.0
    %1764 = vmatpush1.msra.mxu0 0.0
    %1765 = vmatprep.subr.mxu0 0.0
    %1766 = vmatpush1.msra.mxu0 0.0
    %1767 = vmatprep.subr.mxu0 0.0
    %1768 = vmatpush1.msra.mxu0 0.0
    %1769 = vmatprep.subr.mxu0 0.0
    %1770 = vmatpush1.msra.mxu0 0.0
    %1771 = vmatprep.subr.mxu0 0.0
    %1772 = vmatpush1.msra.mxu0 0.0
    %1773 = vmatprep.subr.mxu0 0.0
    %1774 = vmatpush1.msra.mxu0 0.0
    %1775 = vmatprep.subr.mxu0 0.0
    %1776 = vmatpush1.msra.mxu0 0.0
    %1777 = vmatprep.subr.mxu0 0.0
    %1778 = vmatpush1.msra.mxu0 0.0
    %1779 = vmatprep.subr.mxu0 0.0
    %1780 = vmatpush1.msra.mxu0 0.0
    %1781 = vmatprep.subr.mxu0 0.0
    %1782 = vmatpush1.msra.mxu0 0.0
    %1783 = vmatprep.subr.mxu0 0.0
    %1784 = vmatpush1.msra.mxu0 0.0
    %1785 = vmatprep.subr.mxu0 0.0
    %1786 = vmatpush1.msra.mxu0 0.0
    %1787 = vmatprep.subr.mxu0 0.0
    %1788 = vmatpush1.msra.mxu0 0.0
    %1789 = vmatprep.subr.mxu0 0.0
    %1790 = vmatpush1.msra.mxu0 0.0
    %1791 = vmatprep.subr.mxu0 0.0
    %1792 = vmatpush1.msra.mxu0 0.0
    %1793 = vmatprep.subr.mxu0 0.0
    %1794 = vmatpush1.msra.mxu0 0.0
    %1795 = vmatprep.subr.mxu0 0.0
    %1796 = vmatpush1.msra.mxu0 0.0
    %1797 = vmatprep.subr.mxu0 0.0
    %1798 = vmatpush1.msra.mxu0 0.0
    %1799 = vmatprep.subr.mxu0 0.0
    %1800 = vmatpush1.msra.mxu0 0.0
    %1801 = vmatprep.subr.mxu0 0.0
    %1802 = vmatpush1.msra.mxu0 0.0
    %1803 = vmatprep.mubr.f32.mxu0 0.0
    %1804 = vmatmul.mubr.f32.gmra.mrb[0].mxu0 %v1737
    %v1805 = vpop.f32.mrb[0].mxu0
    %v1806 = vadd.f32 0.0, %v1805
    %v1807 = vpop.f32.mrb[0].mxu0
    %1808 = vdwg.mxu0
    %v1810 = vsel %vm1370, %v1360, 0
    %1812 = vmatprep.subr.mxu0 0.0
    %1813 = vmatpush1.msra.mxu0 %v91
    %1814 = vmatprep.subr.mxu0 0.0
    %1815 = vmatpush1.msra.mxu0 0.0
    %1816 = vmatprep.subr.mxu0 0.0
    %1817 = vmatpush1.msra.mxu0 0.0
    %1818 = vmatprep.subr.mxu0 0.0
    %1819 = vmatpush1.msra.mxu0 0.0
    %1820 = vmatprep.subr.mxu0 0.0
    %1821 = vmatpush1.msra.mxu0 0.0
    %1822 = vmatprep.subr.mxu0 0.0
    %1823 = vmatpush1.msra.mxu0 0.0
    %1824 = vmatprep.subr.mxu0 0.0
    %1825 = vmatpush1.msra.mxu0 0.0
    %1826 = vmatprep.subr.mxu0 0.0
    %1827 = vmatpush1.msra.mxu0 0.0
    %1828 = vmatprep.subr.mxu0 0.0
    %1829 = vmatpush1.msra.mxu0 0.0
    %1830 = vmatprep.subr.mxu0 0.0
    %1831 = vmatpush1.msra.mxu0 0.0
    %1832 = vmatprep.subr.mxu0 0.0
    %1833 = vmatpush1.msra.mxu0 0.0
    %1834 = vmatprep.subr.mxu0 0.0
    %1835 = vmatpush1.msra.mxu0 0.0
    %1836 = vmatprep.subr.mxu0 0.0
    %1837 = vmatpush1.msra.mxu0 0.0
    %1838 = vmatprep.subr.mxu0 0.0
    %1839 = vmatpush1.msra.mxu0 0.0
    %1840 = vmatprep.subr.mxu0 0.0
    %1841 = vmatpush1.msra.mxu0 0.0
    %1842 = vmatprep.subr.mxu0 0.0
    %1843 = vmatpush1.msra.mxu0 0.0
    %1844 = vmatprep.subr.mxu0 0.0
    %1845 = vmatpush1.msra.mxu0 0.0
    %1846 = vmatprep.subr.mxu0 0.0
    %1847 = vmatpush1.msra.mxu0 0.0
    %1848 = vmatprep.subr.mxu0 0.0
    %1849 = vmatpush1.msra.mxu0 0.0
    %1850 = vmatprep.subr.mxu0 0.0
    %1851 = vmatpush1.msra.mxu0 0.0
    %1852 = vmatprep.subr.mxu0 0.0
    %1853 = vmatpush1.msra.mxu0 0.0
    %1854 = vmatprep.subr.mxu0 0.0
    %1855 = vmatpush1.msra.mxu0 0.0
    %1856 = vmatprep.subr.mxu0 0.0
    %1857 = vmatpush1.msra.mxu0 0.0
    %1858 = vmatprep.subr.mxu0 0.0
    %1859 = vmatpush1.msra.mxu0 0.0
    %1860 = vmatprep.subr.mxu0 0.0
    %1861 = vmatpush1.msra.mxu0 0.0
    %1862 = vmatprep.subr.mxu0 0.0
    %1863 = vmatpush1.msra.mxu0 0.0
    %1864 = vmatprep.subr.mxu0 0.0
    %1865 = vmatpush1.msra.mxu0 0.0
    %1866 = vmatprep.subr.mxu0 0.0
    %1867 = vmatpush1.msra.mxu0 0.0
    %1868 = vmatprep.subr.mxu0 0.0
    %1869 = vmatpush1.msra.mxu0 0.0
    %1870 = vmatprep.subr.mxu0 0.0
    %1871 = vmatpush1.msra.mxu0 0.0
    %1872 = vmatprep.subr.mxu0 0.0
    %1873 = vmatpush1.msra.mxu0 0.0
    %1874 = vmatprep.subr.mxu0 0.0
    %1875 = vmatpush1.msra.mxu0 0.0
    %1876 = vmatprep.mubr.f32.mxu0 0.0
    %1877 = vmatmul.mubr.f32.gmra.mrb[0].mxu0 %v1810
    %v1878 = vpop.f32.mrb[0].mxu0
    %v1879 = vadd.f32 0.0, %v1878
    %v1880 = vpop.f32.mrb[0].mxu0
    %1881 = vdwg.mxu0
    %v1883 = vsel %vm1370, %v1361, 0
    %1885 = vmatprep.subr.mxu0 0.0
    %1886 = vmatpush1.msra.mxu0 %v92
    %1887 = vmatprep.subr.mxu0 0.0
    %1888 = vmatpush1.msra.mxu0 0.0
    %1889 = vmatprep.subr.mxu0 0.0
    %1890 = vmatpush1.msra.mxu0 0.0
    %1891 = vmatprep.subr.mxu0 0.0
    %1892 = vmatpush1.msra.mxu0 0.0
    %1893 = vmatprep.subr.mxu0 0.0
    %1894 = vmatpush1.msra.mxu0 0.0
    %1895 = vmatprep.subr.mxu0 0.0
    %1896 = vmatpush1.msra.mxu0 0.0
    %1897 = vmatprep.subr.mxu0 0.0
    %1898 = vmatpush1.msra.mxu0 0.0
    %1899 = vmatprep.subr.mxu0 0.0
    %1900 = vmatpush1.msra.mxu0 0.0
    %1901 = vmatprep.subr.mxu0 0.0
    %1902 = vmatpush1.msra.mxu0 0.0
    %1903 = vmatprep.subr.mxu0 0.0
    %1904 = vmatpush1.msra.mxu0 0.0
    %1905 = vmatprep.subr.mxu0 0.0
    %1906 = vmatpush1.msra.mxu0 0.0
    %1907 = vmatprep.subr.mxu0 0.0
    %1908 = vmatpush1.msra.mxu0 0.0
    %1909 = vmatprep.subr.mxu0 0.0
    %1910 = vmatpush1.msra.mxu0 0.0
    %1911 = vmatprep.subr.mxu0 0.0
    %1912 = vmatpush1.msra.mxu0 0.0
    %1913 = vmatprep.subr.mxu0 0.0
    %1914 = vmatpush1.msra.mxu0 0.0
    %1915 = vmatprep.subr.mxu0 0.0
    %1916 = vmatpush1.msra.mxu0 0.0
    %1917 = vmatprep.subr.mxu0 0.0
    %1918 = vmatpush1.msra.mxu0 0.0
    %1919 = vmatprep.subr.mxu0 0.0
    %1920 = vmatpush1.msra.mxu0 0.0
    %1921 = vmatprep.subr.mxu0 0.0
    %1922 = vmatpush1.msra.mxu0 0.0
    %1923 = vmatprep.subr.mxu0 0.0
    %1924 = vmatpush1.msra.mxu0 0.0
    %1925 = vmatprep.subr.mxu0 0.0
    %1926 = vmatpush1.msra.mxu0 0.0
    %1927 = vmatprep.subr.mxu0 0.0
    %1928 = vmatpush1.msra.mxu0 0.0
    %1929 = vmatprep.subr.mxu0 0.0
    %1930 = vmatpush1.msra.mxu0 0.0
    %1931 = vmatprep.subr.mxu0 0.0
    %1932 = vmatpush1.msra.mxu0 0.0
    %1933 = vmatprep.subr.mxu0 0.0
    %1934 = vmatpush1.msra.mxu0 0.0
    %1935 = vmatprep.subr.mxu0 0.0
    %1936 = vmatpush1.msra.mxu0 0.0
    %1937 = vmatprep.subr.mxu0 0.0
    %1938 = vmatpush1.msra.mxu0 0.0
    %1939 = vmatprep.subr.mxu0 0.0
    %1940 = vmatpush1.msra.mxu0 0.0
    %1941 = vmatprep.subr.mxu0 0.0
    %1942 = vmatpush1.msra.mxu0 0.0
    %1943 = vmatprep.subr.mxu0 0.0
    %1944 = vmatpush1.msra.mxu0 0.0
    %1945 = vmatprep.subr.mxu0 0.0
    %1946 = vmatpush1.msra.mxu0 0.0
    %1947 = vmatprep.subr.mxu0 0.0
    %1948 = vmatpush1.msra.mxu0 0.0
    %1949 = vmatprep.mubr.f32.mxu0 0.0
    %1950 = vmatmul.mubr.f32.gmra.mrb[0].mxu0 %v1883
    %v1951 = vpop.f32.mrb[0].mxu0
    %v1952 = vadd.f32 0.0, %v1951
    %v1953 = vpop.f32.mrb[0].mxu0
    %1954 = vdwg.mxu0
    %v1955 = vadd.f32 %v1362, %v1441
    %v1956 = vadd.f32 %v1363, %v1514
    %v1957 = vadd.f32 %v1364, %v1587
    %v1958 = vadd.f32 %v1365, %v1660
    %v1959 = vadd.f32 %v1366, %v1733
    %v1960 = vadd.f32 %v1367, %v1806
    %v1961 = vadd.f32 %v1368, %v1879
    %v1962 = vadd.f32 %v1369, %v1952
    %1963 = vst.msk [vmem:[#allocation2] sm:$0x1] %vm1305, %v1955
    %1964 = vst.msk [vmem:[#allocation2 + $0x1] sm:$0x1] %vm1305, %v1956
    %1965 = vst.msk [vmem:[#allocation2 + $0x2] sm:$0x1] %vm1305, %v1957
    %1966 = vst.msk [vmem:[#allocation2 + $0x3] sm:$0x1] %vm1305, %v1958
    %1967 = vst.msk [vmem:[#allocation2 + $0x4] sm:$0x1] %vm1305, %v1959
    %1968 = vst.msk [vmem:[#allocation2 + $0x5] sm:$0x1] %vm1305, %v1960
    %1969 = vst.msk [vmem:[#allocation2 + $0x6] sm:$0x1] %vm1305, %v1961
    %1970 = vst.msk [vmem:[#allocation2 + $0x7] sm:$0x1] %vm1305, %v1962
    // Predicated region
    $region30: #{tpu_custom_call.1} parent=1 // pred_check
      %p1971 = pneg %p56
    $region31: #{tpu_custom_call.1} parent=1 // pred_check_branch
      %1973 = sbr.rel (%p1971) target = $region33
    $region32: #{tpu_custom_call.1} parent=1 // pred_region
      %v1974 = vld [vmem:[#allocation2] sm:$0x1]
      %v1975 = vld [vmem:[#allocation2 + $0x1] sm:$0x1]
      %v1976 = vld [vmem:[#allocation2 + $0x2] sm:$0x1]
      %v1977 = vld [vmem:[#allocation2 + $0x3] sm:$0x1]
      %v1978 = vld [vmem:[#allocation2 + $0x4] sm:$0x1]
      %v1979 = vld [vmem:[#allocation2 + $0x5] sm:$0x1]
      %v1980 = vld [vmem:[#allocation2 + $0x6] sm:$0x1]
      %v1981 = vld [vmem:[#allocation2 + $0x7] sm:$0x1]
      %1982 = vst.msk [vmem:[#allocation9] sm:$0x1] %vm1305, %v1974
      %1983 = vst.msk [vmem:[#allocation9 + $0x1] sm:$0x1] %vm1305, %v1975
      %1984 = vst.msk [vmem:[#allocation9 + $0x2] sm:$0x1] %vm1305, %v1976
      %1985 = vst.msk [vmem:[#allocation9 + $0x3] sm:$0x1] %vm1305, %v1977
      %1986 = vst.msk [vmem:[#allocation9 + $0x4] sm:$0x1] %vm1305, %v1978
      %1987 = vst.msk [vmem:[#allocation9 + $0x5] sm:$0x1] %vm1305, %v1979
      %1988 = vst.msk [vmem:[#allocation9 + $0x6] sm:$0x1] %vm1305, %v1980
      %1989 = vst.msk [vmem:[#allocation9 + $0x7] sm:$0x1] %vm1305, %v1981
    $region33: #{tpu_custom_call.1} parent=1 // pred_fallthru
      _
    // Predicated region
    $region34: #{tpu_custom_call.1} parent=1 // pred_check
      _
    $region35: #{tpu_custom_call.1} parent=1 // pred_check_branch
      %1991 = sbr.rel (0) target = $region37
    $region36: #{tpu_custom_call.1} parent=1 // pred_region
      %s1993 = ssub.s32 128, 128
      %1994 = vsyncadd [#allocation5], %s1993
      %s1995 = sshll.u32 [#allocation9], 4
      %s1996 = int_to_ptr.vmem [resolvable:$true] %s1995
      %2001 = dma.vmem_to_hbm [thread:$0]  %s1996, 128, %s3, [#allocation5], 16, 16, 1
    $region37: #{tpu_custom_call.1} parent=1 // pred_fallthru
      _
    // Predicated region
    $region38: #{tpu_custom_call.1} parent=1 // pred_check
      _
    $region39: #{tpu_custom_call.1} parent=1 // pred_check_branch
      %2003 = sbr.rel (0) target = $region41
    $region40: #{tpu_custom_call.1} parent=1 // pred_region
      %2004 = dma.done [#allocation5], 128
    $region41: #{tpu_custom_call.1} parent=1 // pred_fallthru
      _
    %2005 = vsyncpa [#allocation4], 1
    %2006 = vsyncpa [#allocation7], 1
    %2007 = vsyncpa [#allocation5], 1

</llo_original>
